<compile_context>
chip_gen: v6e
topology: v6e:2x2x1
jax: 0.10.0
libtpu: 0.0.40
codegen_flags: <defaults>
</compile_context>

<pallas_src>
import jax
import jax.numpy as jnp
from jax.experimental import pallas as pl
from jax.experimental.pallas import tpu as pltpu

# ----------------------------------------------------------------------------
# Synthetic "args"
# ----------------------------------------------------------------------------
HIDDEN = 32                     # args.hidden_size
DIM = 4                         # args.dim
DILATIONS = (1, 2)              # args.dilations
NUM_CLUSTERS = (4, 4)           # args.nums_cluster_each_layer (must all match)
ALPHA = 1.0                     # args.alpha
BATCH = 2
SEQ = 8
# Rows (batch*seq positions) per grid step.  Safe for the 32 MiB scoped VMEM
# default; after lane-packing this can be swept toward 1024-2048 for large N.
MAX_TILE_ROWS = 512


def _round_up(x, m):
    return ((x + m - 1) // m) * m


# ----------------------------------------------------------------------------
# Packed / block-structured weight builders (wrapper side, grid-invariant)
# ----------------------------------------------------------------------------
def _block_diag(w, nc):
    """(r, c) -> (nc*r, nc*c) block-diagonal."""
    r, c = w.shape
    out = jnp.zeros((nc * r, nc * c), w.dtype)
    for f in range(nc):
        out = out.at[f * r:(f + 1) * r, f * c:(f + 1) * c].set(w)
    return out


def _combo_upper(wt, cjn, nc):
    """Per-layer fused RHS for layers > 0.

    Returns (NC*H, NC*(NC*H) + NC*NC):
      [ WT_0 | WT_1 | ... | WT_{NC-1} | blockdiag(cjn^T) ]
    where WT_f has `wt` in row-block f replicated into every column block, so
    feats_packed @ WT_f yields the transform of feature f TILED across all
    center blocks, and the trailing columns are the per-feature cosine dots.
    """
    h = wt.shape[0]
    nch = nc * h
    wt_row_tiled = jnp.tile(wt, (1, nc))                       # (H, NC*H)
    blocks = []
    for f in range(nc):
        blk = jnp.zeros((nch, nch), jnp.float32)
        blk = blk.at[f * h:(f + 1) * h, :].set(wt_row_tiled)
        blocks.append(blk)
    cjn_bd = _block_diag(jnp.transpose(cjn), nc)               # (NC*H, NC*NC)
    return jnp.concatenate(blocks + [cjn_bd], axis=1)


# ----------------------------------------------------------------------------
# Fused assignment kernel (all layers, one row-tile per grid step)
# ----------------------------------------------------------------------------
def _make_assignment_kernel(num_layers, nc, hidden, alpha):
    nch = nc * hidden
    eps2 = 1e-16
    neg_half_alpha = -0.5 * alpha

    def softmax_last(x):
        m = jnp.max(x, axis=-1, keepdims=True)
        e = jnp.exp(x - m)
        return e / jnp.sum(e, axis=-1, keepdims=True)

    def kernel(h_ref, combo0_ref, bt0_ref, combos_ref, bts_ref,
               wj1t_ref, wj2bd_ref, bjt_ref, seln_ref, eexp_ref,
               upd_ref, imp_ref):
        tn = h_ref.shape[1]
        eexp = eexp_ref[...]          # (NC, NC*H)   0/1 center-block expander
        seln = seln_ref[...]          # (NC*H, NC)   0/1 per-feature norm selector

        # ----- layer 0: single feature (the drnn state itself) --------------
        h0 = h_ref[0]                                              # (TN, H)
        combo = jnp.dot(h0, combo0_ref[...],
                        preferred_element_type=jnp.float32)        # (TN, NC*H + NC)
        bt_b = jnp.broadcast_to(bt0_ref[...], (tn, nch))
        # aw over the single feature is identically 1 -> f_t_new == tiled F_tj.
        u_packed = jnp.maximum(combo[:, :nch] + bt_b, 0.0)          # (TN, NC*H)
        dots = combo[:, nch:nch + nc]                               # (TN, NC)
        inv0 = jax.lax.rsqrt(jnp.maximum(
            jnp.sum(h0 * h0, axis=-1, keepdims=True), eps2))        # (TN, 1)
        logits = neg_half_alpha * (1.0 - dots * inv0)
        aw3 = softmax_last(logits)
        # importance = softmax(sum_f aw3) == softmax(aw3): double softmax,
        # exactly what the torch reference computes when num_feas == 1.
        imp = softmax_last(aw3)
        imp_cols = [imp]

        # ----- layers 1..L-1: num_feas == NC features, lane-packed ----------
        for l in range(1, num_layers):
            h = h_ref[l]                                            # (TN, H)
            # feats_packed block f = h @ Wj1 + u_prev_f @ Wj2 + bj
            feats = (jnp.dot(h, wj1t_ref[...],
                             preferred_element_type=jnp.float32)
                     + jnp.dot(u_packed, wj2bd_ref[...],
                               preferred_element_type=jnp.float32)
                     + bjt_ref[...])                                # (TN, NC*H)

            # One MXU call: tiled transforms for all features + cosine dots.
            combo = jnp.dot(feats, combos_ref[l - 1],
                            preferred_element_type=jnp.float32)     # (TN, NC*NCH + NC*NC)
            dots_all = combo[:, nc * nch:nc * nch + nc * nc]        # (TN, NC*NC)

            # Per-feature squared norms via selector matmul (no lane reduce).
            nrm = jnp.dot(feats * feats, seln,
                          preferred_element_type=jnp.float32)       # (TN, NC)
            inv = jax.lax.rsqrt(jnp.maximum(nrm, eps2))             # (TN, NC)

            logits_f = []
            for f in range(nc):
                cos_f = dots_all[:, f * nc:(f + 1) * nc] * inv[:, f:f + 1]
                logits_f.append(neg_half_alpha * (1.0 - cos_f))     # (TN, NC)

            # softmax over centers (per feature)
            aw3_f = [softmax_last(lg) for lg in logits_f]

            # softmax over features (per center)
            m = logits_f[0]
            for lg in logits_f[1:]:
                m = jnp.maximum(m, lg)
            e_f = [jnp.exp(lg - m) for lg in logits_f]
            s = e_f[0]
            for e in e_f[1:]:
                s = s + e
            inv_s = 1.0 / s

            # importance = softmax_c( sum_f aw3_f * prev_imp[:, f] )
            acc = aw3_f[0] * imp[:, 0:1]
            for f in range(1, nc):
                acc = acc + aw3_f[f] * imp[:, f:f + 1]
            imp = softmax_last(acc)
            imp_cols.append(imp)

            # updated feas (packed by center):
            #   u_new[:, c*H+d] = sum_f aw_f[:, c] * relu(feats_f @ Wt + bt)[d]
            bt_b = jnp.broadcast_to(bts_ref[l - 1], (tn, nch))       # hoisted
            u_new = None
            for f in range(nc):
                aw_f = e_f[f] * inv_s                                # (TN, NC)
                awb = jnp.dot(aw_f, eexp,
                              preferred_element_type=jnp.float32)    # (TN, NC*H)
                ftjt = jnp.maximum(combo[:, f * nch:(f + 1) * nch] + bt_b, 0.0)
                contrib = awb * ftjt
                u_new = contrib if u_new is None else u_new + contrib
            u_packed = u_new

        # ----- lane-dense stores (no concatenate of per-center pieces) ------
        upd_ref[...] = u_packed.astype(upd_ref.dtype)
        imp_ref[...] = jnp.concatenate(imp_cols, axis=-1).astype(imp_ref.dtype)

    return kernel


def fused_assignment(h_all, centers, wts, bts, wj1, wj2, bj,
                     *, alpha=ALPHA, max_tile=MAX_TILE_ROWS):
    """h_all: (L, N, H). Returns (updated (N, NC, H), [importance_l (N, NC)])."""
    num_layers, n, hdim = h_all.shape
    nc = centers.shape[1]
    nch = nc * hdim

    # Force >= 2 grid steps when possible so v7x's second TensorCore gets work.
    tile_n = max(8, min(max_tile, _round_up(-(-n // 2), 8)))
    n_pad = _round_up(n, tile_n)
    if n_pad != n:
        h_all = jnp.pad(h_all, ((0, 0), (0, n_pad - n), (0, 0)))

    # Fold 1/||c_j|| into the centers once (grid-invariant).
    cn = jnp.sqrt(jnp.sum(centers * centers, axis=-1, keepdims=True))
    cjn = centers / jnp.maximum(cn, 1e-8)

    # Packed / block-structured weights (built once, grid-invariant inputs).
    combo0 = jnp.concatenate(
        [jnp.tile(wts[0], (1, nc)), jnp.transpose(cjn[0])], axis=1)   # (H, NCH+NC)
    bt0 = jnp.tile(bts[0], (1, nc))                                   # (1, NCH)
    if num_layers > 1:
        combos_rest = jnp.stack(
            [_combo_upper(wts[l], cjn[l], nc) for l in range(1, num_layers)])
        bts_rest = jnp.stack(
            [jnp.tile(bts[l], (1, nc)) for l in range(1, num_layers)])
    else:
        combos_rest = jnp.zeros((1, nch, nc * nch + nc * nc), jnp.float32)
        bts_rest = jnp.zeros((1, 1, nch), jnp.float32)
    wj1_tiled = jnp.tile(wj1, (1, nc))                                # (H, NCH)
    wj2_bd = _block_diag(wj2, nc)                                     # (NCH, NCH)
    bj_tiled = jnp.tile(bj, (1, nc))                                  # (1, NCH)
    seln = jnp.kron(jnp.eye(nc, dtype=jnp.float32),
                    jnp.ones((hdim, 1), jnp.float32))                 # (NCH, NC)
    eexp = jnp.kron(jnp.eye(nc, dtype=jnp.float32),
                    jnp.ones((1, hdim), jnp.float32))                 # (NC, NCH)

    kern = _make_assignment_kernel(num_layers, nc, hdim, alpha)
    grid = (n_pad // tile_n,)

    upd, imp_slab = pl.pallas_call(
        kern,
        out_shape=(jax.ShapeDtypeStruct((n_pad, nch), jnp.float32),
                   jax.ShapeDtypeStruct((n_pad, num_layers * nc), jnp.float32)),
        grid=grid,
        in_specs=[
            pl.BlockSpec((num_layers, tile_n, hdim), lambda i: (0, i, 0)),
            pl.BlockSpec(combo0.shape, lambda i: (0, 0)),
            pl.BlockSpec(bt0.shape, lambda i: (0, 0)),
            pl.BlockSpec(combos_rest.shape, lambda i: (0, 0, 0)),
            pl.BlockSpec(bts_rest.shape, lambda i: (0, 0, 0)),
            pl.BlockSpec(wj1_tiled.shape, lambda i: (0, 0)),
            pl.BlockSpec(wj2_bd.shape, lambda i: (0, 0)),
            pl.BlockSpec(bj_tiled.shape, lambda i: (0, 0)),
            pl.BlockSpec(seln.shape, lambda i: (0, 0)),
            pl.BlockSpec(eexp.shape, lambda i: (0, 0)),
        ],
        out_specs=(pl.BlockSpec((tile_n, nch), lambda i: (i, 0)),
                   pl.BlockSpec((tile_n, num_layers * nc), lambda i: (i, 0))),
        compiler_params=pltpu.CompilerParams(
            dimension_semantics=("parallel",),
            vmem_limit_bytes=32 * 1024 * 1024),
    )(h_all, combo0, bt0, combos_rest, bts_rest,
      wj1_tiled, wj2_bd, bj_tiled, seln, eexp)

    updated = upd[:n].reshape(n, nc, hdim)
    imps = [imp_slab[:n, l * nc:(l + 1) * nc] for l in range(num_layers)]
    return updated, imps


# ----------------------------------------------------------------------------
# Dilated-RNN stand-in as a Pallas kernel (weights resident in VMEM,
# time recurrence in-kernel, input projection hoisted out of the recurrence).
# ----------------------------------------------------------------------------
def _make_drnn_kernel(dilations, seq, bsz, hidden):
    num_layers = len(dilations)

    def kernel(x_ref, wx0_ref, wxr_ref, wh_ref, b_ref, out_ref):
        # Layer-0 input projection for all timesteps at once (one MXU matmul
        # instead of `seq` tiny ones); stored into the output buffer which is
        # then updated in place by the recurrence.
        x2d = x_ref[...].reshape(seq * bsz, x_ref.shape[-1])
        xp = jnp.dot(x2d, wx0_ref[...],
                     preferred_element_type=jnp.float32) + b_ref[0]
        out_ref[0] = xp.reshape(seq, bsz, hidden)

        for l in range(num_layers):
            if l > 0:
                prev2d = out_ref[l - 1].reshape(seq * bsz, hidden)
                xp = jnp.dot(prev2d, wxr_ref[l - 1],
                             preferred_element_type=jnp.float32) + b_ref[l]
                out_ref[l] = xp.reshape(seq, bsz, hidden)
            wh = wh_ref[l]
            d = dilations[l]

            # h_t = tanh(x_t Wx + b + h_{t-d} Wh); positions < t already hold
            # h, positions >= t still hold the projected input.
            def step(t, carry, _l=l, _d=d, _wh=wh):
                h_prev = out_ref[_l, jnp.maximum(t - _d, 0)]        # (bsz, H)
                h_prev = jnp.where(t >= _d, h_prev, 0.0)
                h_t = jnp.tanh(out_ref[_l, t]
                               + jnp.dot(h_prev, _wh,
                                         preferred_element_type=jnp.float32))
                out_ref[_l, t] = h_t
                return carry

            jax.lax.fori_loop(0, seq, step, 0)

    return kernel


def drnn_forward(x_sbd, drnn_params):
    """x_sbd: (seq, batch, dim) -> (num_layers, seq, batch, hidden)."""
    seq, bsz, _ = x_sbd.shape
    num_layers = len(drnn_params)
    wx0 = drnn_params[0][0]
    if num_layers > 1:
        wxr = jnp.stack([p[0] for p in drnn_params[1:]])
    else:
        wxr = jnp.zeros((1, HIDDEN, HIDDEN), jnp.float32)
    whs = jnp.stack([p[1] for p in drnn_params])
    bs = jnp.stack([p[2].reshape(1, HIDDEN) for p in drnn_params])

    kern = _make_drnn_kernel(DILATIONS, seq, bsz, HIDDEN)
    return pl.pallas_call(
        kern,
        out_shape=jax.ShapeDtypeStruct((num_layers, seq, bsz, HIDDEN),
                                       jnp.float32),
    )(x_sbd, wx0, wxr, whs, bs)


# ----------------------------------------------------------------------------
# Parameters (deterministic, in-script)
# ----------------------------------------------------------------------------
def init_params(key):
    keys = iter(jax.random.split(key, 64))
    params = {}

    drnn = []
    in_dim = DIM
    for _ in DILATIONS:
        w_x = jax.random.normal(next(keys), (in_dim, HIDDEN), jnp.float32) * 0.2
        w_h = jax.random.normal(next(keys), (HIDDEN, HIDDEN), jnp.float32) * 0.2
        b = jnp.zeros((HIDDEN,), jnp.float32)
        drnn.append((w_x, w_h, b))
        in_dim = HIDDEN
    params["drnn"] = drnn

    # ConcatFeas joint: nn.Linear(2H, H) — weight (H, 2H); pre-transpose & split.
    wj = (jax.random.normal(next(keys), (HIDDEN, 2 * HIDDEN), jnp.float32)
          / jnp.sqrt(2.0 * HIDDEN))
    bj = jax.random.normal(next(keys), (HIDDEN,), jnp.float32) * 0.01
    params["wj1"] = jnp.transpose(wj[:, :HIDDEN])    # acts on the repeated drnn feature
    params["wj2"] = jnp.transpose(wj[:, HIDDEN:])    # acts on updated_feas
    params["bj"] = bj.reshape(1, HIDDEN)

    assert len(set(NUM_CLUSTERS)) == 1, "fused kernel assumes equal cluster counts"
    centers, w_ts, b_ts = [], [], []
    for ncl in NUM_CLUSTERS:
        c = (jax.random.uniform(next(keys), (ncl, HIDDEN), jnp.float32) - 0.5) * 2.0
        centers.append(c)
        wt = (jax.random.normal(next(keys), (HIDDEN, HIDDEN), jnp.float32)
              / jnp.sqrt(1.0 * HIDDEN))
        bt = jax.random.normal(next(keys), (HIDDEN,), jnp.float32) * 0.01
        w_ts.append(jnp.transpose(wt))               # pre-transposed: x @ Wt
        b_ts.append(bt.reshape(1, HIDDEN))
    params["centers"] = jnp.stack(centers)           # (L, NC, H)
    params["wt"] = jnp.stack(w_ts)                   # (L, H, H)
    params["bt"] = jnp.stack(b_ts)                   # (L, 1, H)
    return params


# ----------------------------------------------------------------------------
# Model_DTSSOCC.forward
# ----------------------------------------------------------------------------
def model_forward(params, data_x):
    # data_x: (batch, seq, dim)
    bsz, seq, _ = data_x.shape
    x_sbd = jnp.transpose(data_x, (1, 0, 2))                  # (seq, batch, dim)
    drnn_sbh = drnn_forward(x_sbd, params["drnn"])            # (L, seq, batch, H)
    drnn_outs = jnp.transpose(drnn_sbh, (0, 2, 1, 3))         # (L, batch, seq, H)

    n = bsz * seq
    h_all = drnn_outs.reshape(len(DILATIONS), n, HIDDEN)      # (L, N, H)

    updated, imps = fused_assignment(
        h_all, params["centers"], params["wt"], params["bt"],
        params["wj1"], params["wj2"], params["bj"])

    nc = NUM_CLUSTERS[-1]
    Rs = [im.reshape(bsz, seq, nc) for im in imps]
    final_feas = updated.reshape(bsz, seq, nc, HIDDEN)
    final_importance = Rs[-1]
    return drnn_outs, final_feas, Rs, final_importance


if __name__ == "__main__":
    key = jax.random.PRNGKey(0)
    pkey, xkey = jax.random.split(key)
    params = init_params(pkey)
    data_x = jax.random.normal(xkey, (BATCH, SEQ, DIM), jnp.float32)

    fwd = jax.jit(model_forward)
    drnn_outs, final_feas, Rs, importance = fwd(params, data_x)
    jax.block_until_ready((drnn_outs, final_feas, importance))
    jax.block_until_ready(Rs)

    ok = bool(jnp.all(jnp.isfinite(final_feas))
              and jnp.all(jnp.isfinite(importance))
              and jnp.all(jnp.isfinite(drnn_outs)))
    if ok:
        print("KERNEL_OK")
    else:
        print("KERNEL_FAIL: non-finite outputs")
</pallas_src>

<mosaic_0001>
module attributes {stable_mosaic.version = 11 : i64} {
  func.func @kernel(%arg0: memref<8x2x4xf32, #tpu.memory_space<vmem>>, %arg1: memref<4x32xf32, #tpu.memory_space<vmem>>, %arg2: memref<1x32x32xf32, #tpu.memory_space<vmem>>, %arg3: memref<2x32x32xf32, #tpu.memory_space<vmem>>, %arg4: memref<2x1x32xf32, #tpu.memory_space<vmem>>, %arg5: memref<2x8x2x32xf32, #tpu.memory_space<vmem>>) attributes {dimension_semantics = [], scalar_prefetch = 0 : i64, scratch_operands = 0 : i64, tpu.core_type = #tpu.core_type<tc>} {
    %c0 = arith.constant 0 : index
    %c0_0 = arith.constant 0 : index
    %c0_1 = arith.constant 0 : index
    %0 = vector.load %arg0[%c0, %c0_0, %c0_1] : memref<8x2x4xf32, #tpu.memory_space<vmem>>, vector<8x2x4xf32>
    %1 = vector.shape_cast %0 : vector<8x2x4xf32> to vector<16x4xf32>
    %c0_2 = arith.constant 0 : index
    %c0_3 = arith.constant 0 : index
    %2 = vector.load %arg1[%c0_2, %c0_3] : memref<4x32xf32, #tpu.memory_space<vmem>>, vector<4x32xf32>
    %cst = arith.constant dense<0.000000e+00> : vector<16x32xf32>
    %3 = tpu.matmul %1, %2, %cst {dimension_numbers = #tpu.dot_dimension_numbers<[1], [0], [0], [1], [0, 0, 1, 1], [], []>} : vector<16x4xf32>, vector<4x32xf32>, vector<16x32xf32> -> vector<16x32xf32>
    %c0_4 = arith.constant 0 : index
    %c0_5 = arith.constant 0 : index
    %c0_6 = arith.constant 0 : index
    %4 = vector.load %arg4[%c0_4, %c0_5, %c0_6] : memref<2x1x32xf32, #tpu.memory_space<vmem>>, vector<1x1x32xf32>
    %5 = vector.shape_cast %4 : vector<1x1x32xf32> to vector<1x32xf32>
    %6 = vector.broadcast %5 : vector<1x32xf32> to vector<16x32xf32>
    %7 = arith.addf %3, %6 : vector<16x32xf32>
    %8 = vector.shape_cast %7 : vector<16x32xf32> to vector<8x2x32xf32>
    %c0_7 = arith.constant 0 : index
    %c0_8 = arith.constant 0 : index
    %c0_9 = arith.constant 0 : index
    %c0_10 = arith.constant 0 : index
    %9 = vector.load %arg5[%c0_7, %c0_8, %c0_9, %c0_10] : memref<2x8x2x32xf32, #tpu.memory_space<vmem>>, vector<1x8x2x32xf32>
    %10 = vector.shape_cast %9 : vector<1x8x2x32xf32> to vector<8x2x32xf32>
    %11 = vector.shape_cast %8 : vector<8x2x32xf32> to vector<1x8x2x32xf32>
    tpu.vector_store %arg5[%c0_7, %c0_8, %c0_9, %c0_10], %11 {strides = array<i32>} : memref<2x8x2x32xf32, #tpu.memory_space<vmem>>, vector<1x8x2x32xf32>,
    %c0_11 = arith.constant 0 : index
    %c0_12 = arith.constant 0 : index
    %c0_13 = arith.constant 0 : index
    %12 = vector.load %arg3[%c0_11, %c0_12, %c0_13] : memref<2x32x32xf32, #tpu.memory_space<vmem>>, vector<1x32x32xf32>
    %13 = vector.shape_cast %12 : vector<1x32x32xf32> to vector<32x32xf32>
    %c0_i32 = arith.constant 0 : i32
    %c8_i32 = arith.constant 8 : i32
    %14 = arith.addi %c0_i32, %c8_i32 : i32
    %c1_i32 = arith.constant 1 : i32
    scf.for %arg6 = %c0_i32 to %14 step %c1_i32  : i32 {
      %c1_i32_36 = arith.constant 1 : i32
      %32 = arith.subi %arg6, %c1_i32_36 : i32
      %c0_i32_37 = arith.constant 0 : i32
      %33 = arith.maxsi %32, %c0_i32_37 : i32
      %c0_38 = arith.constant 0 : index
      %34 = arith.index_cast %33 : i32 to index
      %c0_39 = arith.constant 0 : index
      %c0_40 = arith.constant 0 : index
      %35 = vector.load %arg5[%c0_38, %34, %c0_39, %c0_40] : memref<2x8x2x32xf32, #tpu.memory_space<vmem>>, vector<1x1x2x32xf32>
      %36 = vector.shape_cast %35 : vector<1x1x2x32xf32> to vector<2x32xf32>
      %c1_i32_41 = arith.constant 1 : i32
      %37 = arith.cmpi sge, %arg6, %c1_i32_41 : i32
      %cst_42 = arith.constant 0.000000e+00 : f32
      %38 = vector.broadcast %cst_42 : f32 to vector<2x32xf32>
      %39 = arith.select %37, %36, %38 : vector<2x32xf32>
      %c0_43 = arith.constant 0 : index
      %40 = arith.index_cast %arg6 : i32 to index
      %c0_44 = arith.constant 0 : index
      %c0_45 = arith.constant 0 : index
      %41 = vector.load %arg5[%c0_43, %40, %c0_44, %c0_45] : memref<2x8x2x32xf32, #tpu.memory_space<vmem>>, vector<1x1x2x32xf32>
      %42 = vector.shape_cast %41 : vector<1x1x2x32xf32> to vector<2x32xf32>
      %cst_46 = arith.constant dense<0.000000e+00> : vector<2x32xf32>
      %43 = tpu.matmul %39, %13, %cst_46 {dimension_numbers = #tpu.dot_dimension_numbers<[1], [0], [0], [1], [0, 0, 1, 1], [], []>} : vector<2x32xf32>, vector<32x32xf32>, vector<2x32xf32> -> vector<2x32xf32>
      %44 = arith.addf %42, %43 : vector<2x32xf32>
      %45 = math.tanh %44 : vector<2x32xf32>
      %c0_47 = arith.constant 0 : index
      %46 = arith.index_cast %arg6 : i32 to index
      %c0_48 = arith.constant 0 : index
      %c0_49 = arith.constant 0 : index
      %47 = vector.load %arg5[%c0_47, %46, %c0_48, %c0_49] : memref<2x8x2x32xf32, #tpu.memory_space<vmem>>, vector<1x1x2x32xf32>
      %48 = vector.shape_cast %47 : vector<1x1x2x32xf32> to vector<2x32xf32>
      %49 = vector.shape_cast %45 : vector<2x32xf32> to vector<1x1x2x32xf32>
      tpu.vector_store %arg5[%c0_47, %46, %c0_48, %c0_49], %49 {strides = array<i32>} : memref<2x8x2x32xf32, #tpu.memory_space<vmem>>, vector<1x1x2x32xf32>,
    }
    %c8_i32_14 = arith.constant 8 : i32
    %c0_15 = arith.constant 0 : index
    %c0_16 = arith.constant 0 : index
    %c0_17 = arith.constant 0 : index
    %c0_18 = arith.constant 0 : index
    %15 = vector.load %arg5[%c0_15, %c0_16, %c0_17, %c0_18] : memref<2x8x2x32xf32, #tpu.memory_space<vmem>>, vector<1x8x2x32xf32>
    %16 = vector.shape_cast %15 : vector<1x8x2x32xf32> to vector<8x2x32xf32>
    %17 = vector.shape_cast %16 : vector<8x2x32xf32> to vector<16x32xf32>
    %c0_19 = arith.constant 0 : index
    %c0_20 = arith.constant 0 : index
    %c0_21 = arith.constant 0 : index
    %18 = vector.load %arg2[%c0_19, %c0_20, %c0_21] : memref<1x32x32xf32, #tpu.memory_space<vmem>>, vector<1x32x32xf32>
    %19 = vector.shape_cast %18 : vector<1x32x32xf32> to vector<32x32xf32>
    %cst_22 = arith.constant dense<0.000000e+00> : vector<16x32xf32>
    %20 = tpu.matmul %17, %19, %cst_22 {dimension_numbers = #tpu.dot_dimension_numbers<[1], [0], [0], [1], [0, 0, 1, 1], [], []>} : vector<16x32xf32>, vector<32x32xf32>, vector<16x32xf32> -> vector<16x32xf32>
    %c1 = arith.constant 1 : index
    %c0_23 = arith.constant 0 : index
    %c0_24 = arith.constant 0 : index
    %21 = vector.load %arg4[%c1, %c0_23, %c0_24] : memref<2x1x32xf32, #tpu.memory_space<vmem>>, vector<1x1x32xf32>
    %22 = vector.shape_cast %21 : vector<1x1x32xf32> to vector<1x32xf32>
    %23 = vector.broadcast %22 : vector<1x32xf32> to vector<16x32xf32>
    %24 = arith.addf %20, %23 : vector<16x32xf32>
    %25 = vector.shape_cast %24 : vector<16x32xf32> to vector<8x2x32xf32>
    %c1_25 = arith.constant 1 : index
    %c0_26 = arith.constant 0 : index
    %c0_27 = arith.constant 0 : index
    %c0_28 = arith.constant 0 : index
    %26 = vector.load %arg5[%c1_25, %c0_26, %c0_27, %c0_28] : memref<2x8x2x32xf32, #tpu.memory_space<vmem>>, vector<1x8x2x32xf32>
    %27 = vector.shape_cast %26 : vector<1x8x2x32xf32> to vector<8x2x32xf32>
    %28 = vector.shape_cast %25 : vector<8x2x32xf32> to vector<1x8x2x32xf32>
    tpu.vector_store %arg5[%c1_25, %c0_26, %c0_27, %c0_28], %28 {strides = array<i32>} : memref<2x8x2x32xf32, #tpu.memory_space<vmem>>, vector<1x8x2x32xf32>,
    %c1_29 = arith.constant 1 : index
    %c0_30 = arith.constant 0 : index
    %c0_31 = arith.constant 0 : index
    %29 = vector.load %arg3[%c1_29, %c0_30, %c0_31] : memref<2x32x32xf32, #tpu.memory_space<vmem>>, vector<1x32x32xf32>
    %30 = vector.shape_cast %29 : vector<1x32x32xf32> to vector<32x32xf32>
    %c0_i32_32 = arith.constant 0 : i32
    %c8_i32_33 = arith.constant 8 : i32
    %31 = arith.addi %c0_i32_32, %c8_i32_33 : i32
    %c1_i32_34 = arith.constant 1 : i32
    scf.for %arg6 = %c0_i32_32 to %31 step %c1_i32_34  : i32 {
      %c2_i32 = arith.constant 2 : i32
      %32 = arith.subi %arg6, %c2_i32 : i32
      %c0_i32_36 = arith.constant 0 : i32
      %33 = arith.maxsi %32, %c0_i32_36 : i32
      %c1_37 = arith.constant 1 : index
      %34 = arith.index_cast %33 : i32 to index
      %c0_38 = arith.constant 0 : index
      %c0_39 = arith.constant 0 : index
      %35 = vector.load %arg5[%c1_37, %34, %c0_38, %c0_39] : memref<2x8x2x32xf32, #tpu.memory_space<vmem>>, vector<1x1x2x32xf32>
      %36 = vector.shape_cast %35 : vector<1x1x2x32xf32> to vector<2x32xf32>
      %c2_i32_40 = arith.constant 2 : i32
      %37 = arith.cmpi sge, %arg6, %c2_i32_40 : i32
      %cst_41 = arith.constant 0.000000e+00 : f32
      %38 = vector.broadcast %cst_41 : f32 to vector<2x32xf32>
      %39 = arith.select %37, %36, %38 : vector<2x32xf32>
      %c1_42 = arith.constant 1 : index
      %40 = arith.index_cast %arg6 : i32 to index
      %c0_43 = arith.constant 0 : index
      %c0_44 = arith.constant 0 : index
      %41 = vector.load %arg5[%c1_42, %40, %c0_43, %c0_44] : memref<2x8x2x32xf32, #tpu.memory_space<vmem>>, vector<1x1x2x32xf32>
      %42 = vector.shape_cast %41 : vector<1x1x2x32xf32> to vector<2x32xf32>
      %cst_45 = arith.constant dense<0.000000e+00> : vector<2x32xf32>
      %43 = tpu.matmul %39, %30, %cst_45 {dimension_numbers = #tpu.dot_dimension_numbers<[1], [0], [0], [1], [0, 0, 1, 1], [], []>} : vector<2x32xf32>, vector<32x32xf32>, vector<2x32xf32> -> vector<2x32xf32>
      %44 = arith.addf %42, %43 : vector<2x32xf32>
      %45 = math.tanh %44 : vector<2x32xf32>
      %c1_46 = arith.constant 1 : index
      %46 = arith.index_cast %arg6 : i32 to index
      %c0_47 = arith.constant 0 : index
      %c0_48 = arith.constant 0 : index
      %47 = vector.load %arg5[%c1_46, %46, %c0_47, %c0_48] : memref<2x8x2x32xf32, #tpu.memory_space<vmem>>, vector<1x1x2x32xf32>
      %48 = vector.shape_cast %47 : vector<1x1x2x32xf32> to vector<2x32xf32>
      %49 = vector.shape_cast %45 : vector<2x32xf32> to vector<1x1x2x32xf32>
      tpu.vector_store %arg5[%c1_46, %46, %c0_47, %c0_48], %49 {strides = array<i32>} : memref<2x8x2x32xf32, #tpu.memory_space<vmem>>, vector<1x1x2x32xf32>,
    }
    %c8_i32_35 = arith.constant 8 : i32
    return
  }
}

module attributes {stable_mosaic.version = 11 : i64} {
  func.func @kernel(%arg0: i32, %arg1: memref<2x8x32xf32, #tpu.memory_space<vmem>>, %arg2: memref<32x132xf32, #tpu.memory_space<vmem>>, %arg3: memref<1x128xf32, #tpu.memory_space<vmem>>, %arg4: memref<1x128x528xf32, #tpu.memory_space<vmem>>, %arg5: memref<1x1x128xf32, #tpu.memory_space<vmem>>, %arg6: memref<32x128xf32, #tpu.memory_space<vmem>>, %arg7: memref<128x128xf32, #tpu.memory_space<vmem>>, %arg8: memref<1x128xf32, #tpu.memory_space<vmem>>, %arg9: memref<128x4xf32, #tpu.memory_space<vmem>>, %arg10: memref<4x128xf32, #tpu.memory_space<vmem>>, %arg11: memref<8x128xf32, #tpu.memory_space<vmem>>, %arg12: memref<8x8xf32, #tpu.memory_space<vmem>>) attributes {dimension_semantics = [#tpu.dimension_semantics<parallel>], iteration_bounds = array<i64: 2>, scalar_prefetch = 0 : i64, scratch_operands = 0 : i64, tpu.core_type = #tpu.core_type<tc>, window_params = [{transform_indices = @transform_0, window_bounds = array<i64: 2, 8, 32>}, {pipeline_mode = #tpu.pipeline_mode<synchronous>, transform_indices = @transform_1, window_bounds = array<i64: 32, 132>}, {pipeline_mode = #tpu.pipeline_mode<synchronous>, transform_indices = @transform_2, window_bounds = array<i64: 1, 128>}, {pipeline_mode = #tpu.pipeline_mode<synchronous>, transform_indices = @transform_3, window_bounds = array<i64: 1, 128, 528>}, {pipeline_mode = #tpu.pipeline_mode<synchronous>, transform_indices = @transform_4, window_bounds = array<i64: 1, 1, 128>}, {pipeline_mode = #tpu.pipeline_mode<synchronous>, transform_indices = @transform_5, window_bounds = array<i64: 32, 128>}, {pipeline_mode = #tpu.pipeline_mode<synchronous>, transform_indices = @transform_6, window_bounds = array<i64: 128, 128>}, {pipeline_mode = #tpu.pipeline_mode<synchronous>, transform_indices = @transform_7, window_bounds = array<i64: 1, 128>}, {pipeline_mode = #tpu.pipeline_mode<synchronous>, transform_indices = @transform_8, window_bounds = array<i64: 128, 4>}, {pipeline_mode = #tpu.pipeline_mode<synchronous>, transform_indices = @transform_9, window_bounds = array<i64: 4, 128>}, {transform_indices = @transform_10, window_bounds = array<i64: 8, 128>}, {transform_indices = @transform_11, window_bounds = array<i64: 8, 8>}]} {
    %c0 = arith.constant 0 : index
    %c0_0 = arith.constant 0 : index
    %0 = vector.load %arg10[%c0, %c0_0] : memref<4x128xf32, #tpu.memory_space<vmem>>, vector<4x128xf32>
    %c0_1 = arith.constant 0 : index
    %c0_2 = arith.constant 0 : index
    %1 = vector.load %arg9[%c0_1, %c0_2] : memref<128x4xf32, #tpu.memory_space<vmem>>, vector<128x4xf32>
    %c0_3 = arith.constant 0 : index
    %c0_4 = arith.constant 0 : index
    %c0_5 = arith.constant 0 : index
    %2 = vector.load %arg1[%c0_3, %c0_4, %c0_5] : memref<2x8x32xf32, #tpu.memory_space<vmem>>, vector<1x8x32xf32>
    %3 = vector.shape_cast %2 : vector<1x8x32xf32> to vector<8x32xf32>
    %c0_6 = arith.constant 0 : index
    %c0_7 = arith.constant 0 : index
    %4 = vector.load %arg2[%c0_6, %c0_7] : memref<32x132xf32, #tpu.memory_space<vmem>>, vector<32x132xf32>
    %cst = arith.constant dense<0.000000e+00> : vector<8x132xf32>
    %5 = tpu.matmul %3, %4, %cst {dimension_numbers = #tpu.dot_dimension_numbers<[1], [0], [0], [1], [0, 0, 1, 1], [], []>} : vector<8x32xf32>, vector<32x132xf32>, vector<8x132xf32> -> vector<8x132xf32>
    %c0_8 = arith.constant 0 : index
    %c0_9 = arith.constant 0 : index
    %6 = vector.load %arg3[%c0_8, %c0_9] : memref<1x128xf32, #tpu.memory_space<vmem>>, vector<1x128xf32>
    %7 = vector.shape_cast %6 : vector<1x128xf32> to vector<1x128xf32>
    %8 = vector.broadcast %7 : vector<1x128xf32> to vector<8x128xf32>
    %9 = vector.extract_strided_slice %5 {offsets = [0, 0], sizes = [8, 128], strides = [1, 1]} : vector<8x132xf32> to vector<8x128xf32>
    %10 = arith.addf %9, %8 : vector<8x128xf32>
    %cst_10 = arith.constant 0.000000e+00 : f32
    %11 = vector.broadcast %cst_10 : f32 to vector<8x128xf32>
    %12 = arith.maximumf %10, %11 : vector<8x128xf32>
    %13 = vector.extract_strided_slice %5 {offsets = [0, 128], sizes = [8, 4], strides = [1, 1]} : vector<8x132xf32> to vector<8x4xf32>
    %14 = arith.mulf %3, %3 : vector<8x32xf32>
    %cst_11 = arith.constant dense<0.000000e+00> : vector<8xf32>
    %15 = vector.multi_reduction <add>, %14, %cst_11 [1] : vector<8x32xf32> to vector<8xf32>
    %16 = vector.shape_cast %15 : vector<8xf32> to vector<8x1xf32>
    %cst_12 = arith.constant 1.000000e-16 : f32
    %17 = vector.broadcast %cst_12 : f32 to vector<8x1xf32>
    %18 = arith.maximumf %16, %17 : vector<8x1xf32>
    %19 = math.rsqrt %18 : vector<8x1xf32>
    %20 = vector.broadcast %19 : vector<8x1xf32> to vector<8x4xf32>
    %21 = arith.mulf %13, %20 : vector<8x4xf32>
    %cst_13 = arith.constant 1.000000e+00 : f32
    %22 = vector.broadcast %cst_13 : f32 to vector<8x4xf32>
    %23 = arith.subf %22, %21 : vector<8x4xf32>
    %cst_14 = arith.constant -5.000000e-01 : f32
    %24 = vector.broadcast %cst_14 : f32 to vector<8x4xf32>
    %25 = arith.mulf %24, %23 : vector<8x4xf32>
    %cst_15 = arith.constant dense<0xFF800000> : vector<8xf32>
    %26 = vector.multi_reduction <maximumf>, %25, %cst_15 [1] : vector<8x4xf32> to vector<8xf32>
    %27 = vector.shape_cast %26 : vector<8xf32> to vector<8x1xf32>
    %28 = vector.broadcast %27 : vector<8x1xf32> to vector<8x4xf32>
    %29 = arith.subf %25, %28 : vector<8x4xf32>
    %30 = math.exp %29 : vector<8x4xf32>
    %cst_16 = arith.constant dense<0.000000e+00> : vector<8xf32>
    %31 = vector.multi_reduction <add>, %30, %cst_16 [1] : vector<8x4xf32> to vector<8xf32>
    %32 = vector.shape_cast %31 : vector<8xf32> to vector<8x1xf32>
    %33 = vector.broadcast %32 : vector<8x1xf32> to vector<8x4xf32>
    %34 = arith.divf %30, %33 : vector<8x4xf32>
    %cst_17 = arith.constant dense<0xFF800000> : vector<8xf32>
    %35 = vector.multi_reduction <maximumf>, %34, %cst_17 [1] : vector<8x4xf32> to vector<8xf32>
    %36 = vector.shape_cast %35 : vector<8xf32> to vector<8x1xf32>
    %37 = vector.broadcast %36 : vector<8x1xf32> to vector<8x4xf32>
    %38 = arith.subf %34, %37 : vector<8x4xf32>
    %39 = math.exp %38 : vector<8x4xf32>
    %cst_18 = arith.constant dense<0.000000e+00> : vector<8xf32>
    %40 = vector.multi_reduction <add>, %39, %cst_18 [1] : vector<8x4xf32> to vector<8xf32>
    %41 = vector.shape_cast %40 : vector<8xf32> to vector<8x1xf32>
    %42 = vector.broadcast %41 : vector<8x1xf32> to vector<8x4xf32>
    %43 = arith.divf %39, %42 : vector<8x4xf32>
    %c1 = arith.constant 1 : index
    %c0_19 = arith.constant 0 : index
    %c0_20 = arith.constant 0 : index
    %44 = vector.load %arg1[%c1, %c0_19, %c0_20] : memref<2x8x32xf32, #tpu.memory_space<vmem>>, vector<1x8x32xf32>
    %45 = vector.shape_cast %44 : vector<1x8x32xf32> to vector<8x32xf32>
    %c0_21 = arith.constant 0 : index
    %c0_22 = arith.constant 0 : index
    %46 = vector.load %arg6[%c0_21, %c0_22] : memref<32x128xf32, #tpu.memory_space<vmem>>, vector<32x128xf32>
    %cst_23 = arith.constant dense<0.000000e+00> : vector<8x128xf32>
    %47 = tpu.matmul %45, %46, %cst_23 {dimension_numbers = #tpu.dot_dimension_numbers<[1], [0], [0], [1], [0, 0, 1, 1], [], []>} : vector<8x32xf32>, vector<32x128xf32>, vector<8x128xf32> -> vector<8x128xf32>
    %c0_24 = arith.constant 0 : index
    %c0_25 = arith.constant 0 : index
    %48 = vector.load %arg7[%c0_24, %c0_25] : memref<128x128xf32, #tpu.memory_space<vmem>>, vector<128x128xf32>
    %cst_26 = arith.constant dense<0.000000e+00> : vector<8x128xf32>
    %49 = tpu.matmul %12, %48, %cst_26 {dimension_numbers = #tpu.dot_dimension_numbers<[1], [0], [0], [1], [0, 0, 1, 1], [], []>} : vector<8x128xf32>, vector<128x128xf32>, vector<8x128xf32> -> vector<8x128xf32>
    %50 = arith.addf %47, %49 : vector<8x128xf32>
    %c0_27 = arith.constant 0 : index
    %c0_28 = arith.constant 0 : index
    %51 = vector.load %arg8[%c0_27, %c0_28] : memref<1x128xf32, #tpu.memory_space<vmem>>, vector<1x128xf32>
    %52 = vector.broadcast %51 : vector<1x128xf32> to vector<8x128xf32>
    %53 = arith.addf %50, %52 : vector<8x128xf32>
    %c0_29 = arith.constant 0 : index
    %c0_30 = arith.constant 0 : index
    %c0_31 = arith.constant 0 : index
    %54 = vector.load %arg4[%c0_29, %c0_30, %c0_31] : memref<1x128x528xf32, #tpu.memory_space<vmem>>, vector<1x128x528xf32>
    %55 = vector.shape_cast %54 : vector<1x128x528xf32> to vector<128x528xf32>
    %cst_32 = arith.constant dense<0.000000e+00> : vector<8x528xf32>
    %56 = tpu.matmul %53, %55, %cst_32 {dimension_numbers = #tpu.dot_dimension_numbers<[1], [0], [0], [1], [0, 0, 1, 1], [], []>} : vector<8x128xf32>, vector<128x528xf32>, vector<8x528xf32> -> vector<8x528xf32>
    %57 = vector.extract_strided_slice %56 {offsets = [0, 512], sizes = [8, 16], strides = [1, 1]} : vector<8x528xf32> to vector<8x16xf32>
    %58 = arith.mulf %53, %53 : vector<8x128xf32>
    %cst_33 = arith.constant dense<0.000000e+00> : vector<8x4xf32>
    %59 = tpu.matmul %58, %1, %cst_33 {dimension_numbers = #tpu.dot_dimension_numbers<[1], [0], [0], [1], [0, 0, 1, 1], [], []>} : vector<8x128xf32>, vector<128x4xf32>, vector<8x4xf32> -> vector<8x4xf32>
    %cst_34 = arith.constant 1.000000e-16 : f32
    %60 = vector.broadcast %cst_34 : f32 to vector<8x4xf32>
    %61 = arith.maximumf %59, %60 : vector<8x4xf32>
    %62 = math.rsqrt %61 : vector<8x4xf32>
    %63 = vector.extract_strided_slice %57 {offsets = [0, 0], sizes = [8, 4], strides = [1, 1]} : vector<8x16xf32> to vector<8x4xf32>
    %64 = vector.extract_strided_slice %62 {offsets = [0, 0], sizes = [8, 1], strides = [1, 1]} : vector<8x4xf32> to vector<8x1xf32>
    %65 = vector.broadcast %64 : vector<8x1xf32> to vector<8x4xf32>
    %66 = arith.mulf %63, %65 : vector<8x4xf32>
    %cst_35 = arith.constant 1.000000e+00 : f32
    %67 = vector.broadcast %cst_35 : f32 to vector<8x4xf32>
    %68 = arith.subf %67, %66 : vector<8x4xf32>
    %cst_36 = arith.constant -5.000000e-01 : f32
    %69 = vector.broadcast %cst_36 : f32 to vector<8x4xf32>
    %70 = arith.mulf %69, %68 : vector<8x4xf32>
    %71 = vector.extract_strided_slice %57 {offsets = [0, 4], sizes = [8, 4], strides = [1, 1]} : vector<8x16xf32> to vector<8x4xf32>
    %72 = vector.extract_strided_slice %62 {offsets = [0, 1], sizes = [8, 1], strides = [1, 1]} : vector<8x4xf32> to vector<8x1xf32>
    %73 = vector.broadcast %72 : vector<8x1xf32> to vector<8x4xf32>
    %74 = arith.mulf %71, %73 : vector<8x4xf32>
    %cst_37 = arith.constant 1.000000e+00 : f32
    %75 = vector.broadcast %cst_37 : f32 to vector<8x4xf32>
    %76 = arith.subf %75, %74 : vector<8x4xf32>
    %cst_38 = arith.constant -5.000000e-01 : f32
    %77 = vector.broadcast %cst_38 : f32 to vector<8x4xf32>
    %78 = arith.mulf %77, %76 : vector<8x4xf32>
    %79 = vector.extract_strided_slice %57 {offsets = [0, 8], sizes = [8, 4], strides = [1, 1]} : vector<8x16xf32> to vector<8x4xf32>
    %80 = vector.extract_strided_slice %62 {offsets = [0, 2], sizes = [8, 1], strides = [1, 1]} : vector<8x4xf32> to vector<8x1xf32>
    %81 = vector.broadcast %80 : vector<8x1xf32> to vector<8x4xf32>
    %82 = arith.mulf %79, %81 : vector<8x4xf32>
    %cst_39 = arith.constant 1.000000e+00 : f32
    %83 = vector.broadcast %cst_39 : f32 to vector<8x4xf32>
    %84 = arith.subf %83, %82 : vector<8x4xf32>
    %cst_40 = arith.constant -5.000000e-01 : f32
    %85 = vector.broadcast %cst_40 : f32 to vector<8x4xf32>
    %86 = arith.mulf %85, %84 : vector<8x4xf32>
    %87 = vector.extract_strided_slice %57 {offsets = [0, 12], sizes = [8, 4], strides = [1, 1]} : vector<8x16xf32> to vector<8x4xf32>
    %88 = vector.extract_strided_slice %62 {offsets = [0, 3], sizes = [8, 1], strides = [1, 1]} : vector<8x4xf32> to vector<8x1xf32>
    %89 = vector.broadcast %88 : vector<8x1xf32> to vector<8x4xf32>
    %90 = arith.mulf %87, %89 : vector<8x4xf32>
    %cst_41 = arith.constant 1.000000e+00 : f32
    %91 = vector.broadcast %cst_41 : f32 to vector<8x4xf32>
    %92 = arith.subf %91, %90 : vector<8x4xf32>
    %cst_42 = arith.constant -5.000000e-01 : f32
    %93 = vector.broadcast %cst_42 : f32 to vector<8x4xf32>
    %94 = arith.mulf %93, %92 : vector<8x4xf32>
    %cst_43 = arith.constant dense<0xFF800000> : vector<8xf32>
    %95 = vector.multi_reduction <maximumf>, %70, %cst_43 [1] : vector<8x4xf32> to vector<8xf32>
    %96 = vector.shape_cast %95 : vector<8xf32> to vector<8x1xf32>
    %97 = vector.broadcast %96 : vector<8x1xf32> to vector<8x4xf32>
    %98 = arith.subf %70, %97 : vector<8x4xf32>
    %99 = math.exp %98 : vector<8x4xf32>
    %cst_44 = arith.constant dense<0.000000e+00> : vector<8xf32>
    %100 = vector.multi_reduction <add>, %99, %cst_44 [1] : vector<8x4xf32> to vector<8xf32>
    %101 = vector.shape_cast %100 : vector<8xf32> to vector<8x1xf32>
    %102 = vector.broadcast %101 : vector<8x1xf32> to vector<8x4xf32>
    %103 = arith.divf %99, %102 : vector<8x4xf32>
    %cst_45 = arith.constant dense<0xFF800000> : vector<8xf32>
    %104 = vector.multi_reduction <maximumf>, %78, %cst_45 [1] : vector<8x4xf32> to vector<8xf32>
    %105 = vector.shape_cast %104 : vector<8xf32> to vector<8x1xf32>
    %106 = vector.broadcast %105 : vector<8x1xf32> to vector<8x4xf32>
    %107 = arith.subf %78, %106 : vector<8x4xf32>
    %108 = math.exp %107 : vector<8x4xf32>
    %cst_46 = arith.constant dense<0.000000e+00> : vector<8xf32>
    %109 = vector.multi_reduction <add>, %108, %cst_46 [1] : vector<8x4xf32> to vector<8xf32>
    %110 = vector.shape_cast %109 : vector<8xf32> to vector<8x1xf32>
    %111 = vector.broadcast %110 : vector<8x1xf32> to vector<8x4xf32>
    %112 = arith.divf %108, %111 : vector<8x4xf32>
    %cst_47 = arith.constant dense<0xFF800000> : vector<8xf32>
    %113 = vector.multi_reduction <maximumf>, %86, %cst_47 [1] : vector<8x4xf32> to vector<8xf32>
    %114 = vector.shape_cast %113 : vector<8xf32> to vector<8x1xf32>
    %115 = vector.broadcast %114 : vector<8x1xf32> to vector<8x4xf32>
    %116 = arith.subf %86, %115 : vector<8x4xf32>
    %117 = math.exp %116 : vector<8x4xf32>
    %cst_48 = arith.constant dense<0.000000e+00> : vector<8xf32>
    %118 = vector.multi_reduction <add>, %117, %cst_48 [1] : vector<8x4xf32> to vector<8xf32>
    %119 = vector.shape_cast %118 : vector<8xf32> to vector<8x1xf32>
    %120 = vector.broadcast %119 : vector<8x1xf32> to vector<8x4xf32>
    %121 = arith.divf %117, %120 : vector<8x4xf32>
    %cst_49 = arith.constant dense<0xFF800000> : vector<8xf32>
    %122 = vector.multi_reduction <maximumf>, %94, %cst_49 [1] : vector<8x4xf32> to vector<8xf32>
    %123 = vector.shape_cast %122 : vector<8xf32> to vector<8x1xf32>
    %124 = vector.broadcast %123 : vector<8x1xf32> to vector<8x4xf32>
    %125 = arith.subf %94, %124 : vector<8x4xf32>
    %126 = math.exp %125 : vector<8x4xf32>
    %cst_50 = arith.constant dense<0.000000e+00> : vector<8xf32>
    %127 = vector.multi_reduction <add>, %126, %cst_50 [1] : vector<8x4xf32> to vector<8xf32>
    %128 = vector.shape_cast %127 : vector<8xf32> to vector<8x1xf32>
    %129 = vector.broadcast %128 : vector<8x1xf32> to vector<8x4xf32>
    %130 = arith.divf %126, %129 : vector<8x4xf32>
    %131 = arith.maximumf %70, %78 : vector<8x4xf32>
    %132 = arith.maximumf %131, %86 : vector<8x4xf32>
    %133 = arith.maximumf %132, %94 : vector<8x4xf32>
    %134 = arith.subf %70, %133 : vector<8x4xf32>
    %135 = math.exp %134 : vector<8x4xf32>
    %136 = arith.subf %78, %133 : vector<8x4xf32>
    %137 = math.exp %136 : vector<8x4xf32>
    %138 = arith.subf %86, %133 : vector<8x4xf32>
    %139 = math.exp %138 : vector<8x4xf32>
    %140 = arith.subf %94, %133 : vector<8x4xf32>
    %141 = math.exp %140 : vector<8x4xf32>
    %142 = arith.addf %135, %137 : vector<8x4xf32>
    %143 = arith.addf %142, %139 : vector<8x4xf32>
    %144 = arith.addf %143, %141 : vector<8x4xf32>
    %cst_51 = arith.constant 1.000000e+00 : f32
    %145 = vector.broadcast %cst_51 : f32 to vector<8x4xf32>
    %146 = arith.divf %145, %144 : vector<8x4xf32>
    %147 = vector.extract_strided_slice %43 {offsets = [0, 0], sizes = [8, 1], strides = [1, 1]} : vector<8x4xf32> to vector<8x1xf32>
    %148 = vector.broadcast %147 : vector<8x1xf32> to vector<8x4xf32>
    %149 = arith.mulf %103, %148 : vector<8x4xf32>
    %150 = vector.extract_strided_slice %43 {offsets = [0, 1], sizes = [8, 1], strides = [1, 1]} : vector<8x4xf32> to vector<8x1xf32>
    %151 = vector.broadcast %150 : vector<8x1xf32> to vector<8x4xf32>
    %152 = arith.mulf %112, %151 : vector<8x4xf32>
    %153 = arith.addf %149, %152 : vector<8x4xf32>
    %154 = vector.extract_strided_slice %43 {offsets = [0, 2], sizes = [8, 1], strides = [1, 1]} : vector<8x4xf32> to vector<8x1xf32>
    %155 = vector.broadcast %154 : vector<8x1xf32> to vector<8x4xf32>
    %156 = arith.mulf %121, %155 : vector<8x4xf32>
    %157 = arith.addf %153, %156 : vector<8x4xf32>
    %158 = vector.extract_strided_slice %43 {offsets = [0, 3], sizes = [8, 1], strides = [1, 1]} : vector<8x4xf32> to vector<8x1xf32>
    %159 = vector.broadcast %158 : vector<8x1xf32> to vector<8x4xf32>
    %160 = arith.mulf %130, %159 : vector<8x4xf32>
    %161 = arith.addf %157, %160 : vector<8x4xf32>
    %cst_52 = arith.constant dense<0xFF800000> : vector<8xf32>
    %162 = vector.multi_reduction <maximumf>, %161, %cst_52 [1] : vector<8x4xf32> to vector<8xf32>
    %163 = vector.shape_cast %162 : vector<8xf32> to vector<8x1xf32>
    %164 = vector.broadcast %163 : vector<8x1xf32> to vector<8x4xf32>
    %165 = arith.subf %161, %164 : vector<8x4xf32>
    %166 = math.exp %165 : vector<8x4xf32>
    %cst_53 = arith.constant dense<0.000000e+00> : vector<8xf32>
    %167 = vector.multi_reduction <add>, %166, %cst_53 [1] : vector<8x4xf32> to vector<8xf32>
    %168 = vector.shape_cast %167 : vector<8xf32> to vector<8x1xf32>
    %169 = vector.broadcast %168 : vector<8x1xf32> to vector<8x4xf32>
    %170 = arith.divf %166, %169 : vector<8x4xf32>
    %c0_54 = arith.constant 0 : index
    %c0_55 = arith.constant 0 : index
    %c0_56 = arith.constant 0 : index
    %171 = vector.load %arg5[%c0_54, %c0_55, %c0_56] : memref<1x1x128xf32, #tpu.memory_space<vmem>>, vector<1x1x128xf32>
    %172 = vector.shape_cast %171 : vector<1x1x128xf32> to vector<1x128xf32>
    %173 = vector.shape_cast %172 : vector<1x128xf32> to vector<1x128xf32>
    %174 = vector.broadcast %173 : vector<1x128xf32> to vector<8x128xf32>
    %175 = arith.mulf %135, %146 : vector<8x4xf32>
    %cst_57 = arith.constant dense<0.000000e+00> : vector<8x128xf32>
    %176 = tpu.matmul %175, %0, %cst_57 {dimension_numbers = #tpu.dot_dimension_numbers<[1], [0], [0], [1], [0, 0, 1, 1], [], []>} : vector<8x4xf32>, vector<4x128xf32>, vector<8x128xf32> -> vector<8x128xf32>
    %177 = vector.extract_strided_slice %56 {offsets = [0, 0], sizes = [8, 128], strides = [1, 1]} : vector<8x528xf32> to vector<8x128xf32>
    %178 = arith.addf %177, %174 : vector<8x128xf32>
    %cst_58 = arith.constant 0.000000e+00 : f32
    %179 = vector.broadcast %cst_58 : f32 to vector<8x128xf32>
    %180 = arith.maximumf %178, %179 : vector<8x128xf32>
    %181 = arith.mulf %176, %180 : vector<8x128xf32>
    %182 = arith.mulf %137, %146 : vector<8x4xf32>
    %cst_59 = arith.constant dense<0.000000e+00> : vector<8x128xf32>
    %183 = tpu.matmul %182, %0, %cst_59 {dimension_numbers = #tpu.dot_dimension_numbers<[1], [0], [0], [1], [0, 0, 1, 1], [], []>} : vector<8x4xf32>, vector<4x128xf32>, vector<8x128xf32> -> vector<8x128xf32>
    %184 = vector.extract_strided_slice %56 {offsets = [0, 128], sizes = [8, 128], strides = [1, 1]} : vector<8x528xf32> to vector<8x128xf32>
    %185 = arith.addf %184, %174 : vector<8x128xf32>
    %cst_60 = arith.constant 0.000000e+00 : f32
    %186 = vector.broadcast %cst_60 : f32 to vector<8x128xf32>
    %187 = arith.maximumf %185, %186 : vector<8x128xf32>
    %188 = arith.mulf %183, %187 : vector<8x128xf32>
    %189 = arith.addf %181, %188 : vector<8x128xf32>
    %190 = arith.mulf %139, %146 : vector<8x4xf32>
    %cst_61 = arith.constant dense<0.000000e+00> : vector<8x128xf32>
    %191 = tpu.matmul %190, %0, %cst_61 {dimension_numbers = #tpu.dot_dimension_numbers<[1], [0], [0], [1], [0, 0, 1, 1], [], []>} : vector<8x4xf32>, vector<4x128xf32>, vector<8x128xf32> -> vector<8x128xf32>
    %192 = vector.extract_strided_slice %56 {offsets = [0, 256], sizes = [8, 128], strides = [1, 1]} : vector<8x528xf32> to vector<8x128xf32>
    %193 = arith.addf %192, %174 : vector<8x128xf32>
    %cst_62 = arith.constant 0.000000e+00 : f32
    %194 = vector.broadcast %cst_62 : f32 to vector<8x128xf32>
    %195 = arith.maximumf %193, %194 : vector<8x128xf32>
    %196 = arith.mulf %191, %195 : vector<8x128xf32>
    %197 = arith.addf %189, %196 : vector<8x128xf32>
    %198 = arith.mulf %141, %146 : vector<8x4xf32>
    %cst_63 = arith.constant dense<0.000000e+00> : vector<8x128xf32>
    %199 = tpu.matmul %198, %0, %cst_63 {dimension_numbers = #tpu.dot_dimension_numbers<[1], [0], [0], [1], [0, 0, 1, 1], [], []>} : vector<8x4xf32>, vector<4x128xf32>, vector<8x128xf32> -> vector<8x128xf32>
    %200 = vector.extract_strided_slice %56 {offsets = [0, 384], sizes = [8, 128], strides = [1, 1]} : vector<8x528xf32> to vector<8x128xf32>
    %201 = arith.addf %200, %174 : vector<8x128xf32>
    %cst_64 = arith.constant 0.000000e+00 : f32
    %202 = vector.broadcast %cst_64 : f32 to vector<8x128xf32>
    %203 = arith.maximumf %201, %202 : vector<8x128xf32>
    %204 = arith.mulf %199, %203 : vector<8x128xf32>
    %205 = arith.addf %197, %204 : vector<8x128xf32>
    %c0_65 = arith.constant 0 : index
    %c0_66 = arith.constant 0 : index
    %206 = vector.load %arg11[%c0_65, %c0_66] : memref<8x128xf32, #tpu.memory_space<vmem>>, vector<8x128xf32>
    tpu.vector_store %arg11[%c0_65, %c0_66], %205 {strides = array<i32>} : memref<8x128xf32, #tpu.memory_space<vmem>>, vector<8x128xf32>,
    %207 = tpu.concatenate %43, %170 in 1 : vector<8x4xf32>, vector<8x4xf32> -> vector<8x8xf32>
    %c0_67 = arith.constant 0 : index
    %c0_68 = arith.constant 0 : index
    %208 = vector.load %arg12[%c0_67, %c0_68] : memref<8x8xf32, #tpu.memory_space<vmem>>, vector<8x8xf32>
    tpu.vector_store %arg12[%c0_67, %c0_68], %207 {strides = array<i32>} : memref<8x8xf32, #tpu.memory_space<vmem>>, vector<8x8xf32>,
    return
  }
  func.func @transform_0(%arg0: i32) -> (i32, i32, i32) {
    %c0_i32 = arith.constant 0 : i32
    %c0_i32_0 = arith.constant 0 : i32
    %c0_i32_1 = arith.constant 0 : i32
    return %c0_i32, %arg0, %c0_i32_0 : i32, i32, i32
  }
  func.func @transform_1(%arg0: i32) -> (i32, i32) {
    %c0_i32 = arith.constant 0 : i32
    %c0_i32_0 = arith.constant 0 : i32
    %c0_i32_1 = arith.constant 0 : i32
    return %c0_i32, %c0_i32_0 : i32, i32
  }
  func.func @transform_2(%arg0: i32) -> (i32, i32) {
    %c0_i32 = arith.constant 0 : i32
    %c0_i32_0 = arith.constant 0 : i32
    %c0_i32_1 = arith.constant 0 : i32
    return %c0_i32, %c0_i32_0 : i32, i32
  }
  func.func @transform_3(%arg0: i32) -> (i32, i32, i32) {
    %c0_i32 = arith.constant 0 : i32
    %c0_i32_0 = arith.constant 0 : i32
    %c0_i32_1 = arith.constant 0 : i32
    %c0_i32_2 = arith.constant 0 : i32
    return %c0_i32, %c0_i32_0, %c0_i32_1 : i32, i32, i32
  }
  func.func @transform_4(%arg0: i32) -> (i32, i32, i32) {
    %c0_i32 = arith.constant 0 : i32
    %c0_i32_0 = arith.constant 0 : i32
    %c0_i32_1 = arith.constant 0 : i32
    %c0_i32_2 = arith.constant 0 : i32
    return %c0_i32, %c0_i32_0, %c0_i32_1 : i32, i32, i32
  }
  func.func @transform_5(%arg0: i32) -> (i32, i32) {
    %c0_i32 = arith.constant 0 : i32
    %c0_i32_0 = arith.constant 0 : i32
    %c0_i32_1 = arith.constant 0 : i32
    return %c0_i32, %c0_i32_0 : i32, i32
  }
  func.func @transform_6(%arg0: i32) -> (i32, i32) {
    %c0_i32 = arith.constant 0 : i32
    %c0_i32_0 = arith.constant 0 : i32
    %c0_i32_1 = arith.constant 0 : i32
    return %c0_i32, %c0_i32_0 : i32, i32
  }
  func.func @transform_7(%arg0: i32) -> (i32, i32) {
    %c0_i32 = arith.constant 0 : i32
    %c0_i32_0 = arith.constant 0 : i32
    %c0_i32_1 = arith.constant 0 : i32
    return %c0_i32, %c0_i32_0 : i32, i32
  }
  func.func @transform_8(%arg0: i32) -> (i32, i32) {
    %c0_i32 = arith.constant 0 : i32
    %c0_i32_0 = arith.constant 0 : i32
    %c0_i32_1 = arith.constant 0 : i32
    return %c0_i32, %c0_i32_0 : i32, i32
  }
  func.func @transform_9(%arg0: i32) -> (i32, i32) {
    %c0_i32 = arith.constant 0 : i32
    %c0_i32_0 = arith.constant 0 : i32
    %c0_i32_1 = arith.constant 0 : i32
    return %c0_i32, %c0_i32_0 : i32, i32
  }
  func.func @transform_10(%arg0: i32) -> (i32, i32) {
    %c0_i32 = arith.constant 0 : i32
    %c0_i32_0 = arith.constant 0 : i32
    return %arg0, %c0_i32 : i32, i32
  }
  func.func @transform_11(%arg0: i32) -> (i32, i32) {
    %c0_i32 = arith.constant 0 : i32
    %c0_i32_0 = arith.constant 0 : i32
    return %arg0, %c0_i32 : i32, i32
  }
}

</mosaic_0001>

<llo_original>
// kernel: model_forward.2
$region0: #{model_forward.2}
  #allocation0 [shape = 'u32[]', space=smem, size = 0x4, offset = 0x4, fixed_abs, tag = 'smem constant byte address 0x4 - core index']
  #allocation1 [shape = 'u32[144,128]{1,0:T(1,128)}', space=vmem, size = 0x12000, scoped, tag = 'internal scratch']
  %s0 = inlined_call_operand.vmem [shape: f32[8,2,4], index: 0, kind: input, shape index: {}]
  %s1 = inlined_call_operand.vmem [shape: f32[4,32], index: 1, kind: input, shape index: {}]
  %s2 = inlined_call_operand.vmem [shape: f32[1,32,32], index: 2, kind: input, shape index: {}]
  %s3 = inlined_call_operand.vmem [shape: f32[2,32,32], index: 3, kind: input, shape index: {}]
  %s4 = inlined_call_operand.vmem [shape: f32[2,1,32], index: 4, kind: input, shape index: {}]
  %s5 = inlined_call_operand.vmem [shape: f32[2,8,2,32], index: 5, kind: output, shape index: {}]
  %s6 = sld [smem:[#allocation0]]
  $region44: #{model_forward.2} parent=0
    _
  %s8 = ssub.s32 1, %s6
  %s9 = scalar_select 0, %s8, %s6
  // Predicated region
  $region2: #{model_forward.2} parent=0 // pred_check
    _
  $region3: #{model_forward.2} parent=0 // pred_check_branch
    %11 = sbr.rel (0) target = $region5
  $region4: #{model_forward.2} parent=0 // pred_region
    _
  $region5: #{model_forward.2} parent=0 // pred_fallthru
    _
  // Predicated region
  $region6: #{model_forward.2} parent=0 // pred_check
    _
  $region7: #{model_forward.2} parent=0 // pred_check_branch
    %13 = sbr.rel (0) target = $region9
  $region8: #{model_forward.2} parent=0 // pred_region
    _
  $region9: #{model_forward.2} parent=0 // pred_fallthru
    _
  // Predicated region
  $region10: #{model_forward.2} parent=0 // pred_check
    _
  $region11: #{model_forward.2} parent=0 // pred_check_branch
    %15 = sbr.rel (0) target = $region13
  $region12: #{model_forward.2} parent=0 // pred_region
    _
  $region13: #{model_forward.2} parent=0 // pred_fallthru
    _
  // Predicated region
  $region14: #{model_forward.2} parent=0 // pred_check
    _
  $region15: #{model_forward.2} parent=0 // pred_check_branch
    %17 = sbr.rel (0) target = $region17
  $region16: #{model_forward.2} parent=0 // pred_region
    _
  $region17: #{model_forward.2} parent=0 // pred_fallthru
    _
  // Predicated region
  $region18: #{model_forward.2} parent=0 // pred_check
    _
  $region19: #{model_forward.2} parent=0 // pred_check_branch
    %19 = sbr.rel (0) target = $region21
  $region20: #{model_forward.2} parent=0 // pred_region
    _
  $region21: #{model_forward.2} parent=0 // pred_fallthru
    _
  %v20 = vld [vmem:[%s0] sm:$0x3]
  %v21 = vld [vmem:[%s0 + $0x2] sm:$0x3]
  %v22 = vld [vmem:[%s0 + $0x4] sm:$0x3]
  %v23 = vld [vmem:[%s0 + $0x6] sm:$0x3]
  %v24 = vld [vmem:[%s0 + $0x8] sm:$0x3]
  %v25 = vld [vmem:[%s0 + $0xa] sm:$0x3]
  %v26 = vld [vmem:[%s0 + $0xc] sm:$0x3]
  %v27 = vld [vmem:[%s0 + $0xe] sm:$0x3]
  %v28 = vld [vmem:[%s1] sm:$0xf]
  %v29 = vld [vmem:[%s4] sm:$0x1]
  %v31 = vlaneseq
  %v32 = vshrl.u32 %v31, 7
  %v33 = vsub.s32 0, %v32
  %v34 = vrot.slane %v29, %v33
  %v44 = vcombine.low %v20, %v21
  %v45 = vcombine.low %v22, %v23
  %v47 = vunpack.c.l.s4 1983009808
  %v48 = vunpack.c.0.s8 %v47
  %v49 = vlaneseq
  %v50 = vshrl.u32 %v49, 7
  %v51 = vsub.s32 %v48, %v50
  %v52 = vrot.slane %v44, %v51
  %v54 = vunpack.c.l.s4 1983009808
  %v55 = vunpack.c.0.s8 %v54
  %v56 = vlaneseq
  %v57 = vshrl.u32 %v56, 7
  %v58 = vsub.s32 %v55, %v57
  %v59 = vrot.slane %v45, %v58
  %v60 = vcombine.low %v52, %v59
  %v61 = vcombine.low %v24, %v25
  %v62 = vcombine.low %v26, %v27
  %v64 = vunpack.c.l.s4 1983009808
  %v65 = vunpack.c.0.s8 %v64
  %v66 = vlaneseq
  %v67 = vshrl.u32 %v66, 7
  %v68 = vsub.s32 %v65, %v67
  %v69 = vrot.slane %v61, %v68
  %v71 = vunpack.c.l.s4 1983009808
  %v72 = vunpack.c.0.s8 %v71
  %v73 = vlaneseq
  %v74 = vshrl.u32 %v73, 7
  %v75 = vsub.s32 %v72, %v74
  %v76 = vrot.slane %v62, %v75
  %v77 = vcombine.low %v69, %v76
  %vm78 = vcmask 31744
  %v79 = vsel %vm78, %v60, 0
  %v81 = vsel %vm78, %v77, 0
  %vm83 = vcmask 1043456
  %v85 = vsel %vm83, %v28, 0
  %87 = vmatprep.subr.mxu0 0.0
  %88 = vmatpush1.msra.mxu0 0.0
  %89 = vmatprep.subr.mxu0 0.0
  %90 = vmatpush1.msra.mxu0 0.0
  %91 = vmatprep.subr.mxu0 0.0
  %92 = vmatpush1.msra.mxu0 0.0
  %93 = vmatprep.subr.mxu0 0.0
  %94 = vmatpush1.msra.mxu0 0.0
  %95 = vmatprep.subr.mxu0 0.0
  %96 = vmatpush1.msra.mxu0 0.0
  %97 = vmatprep.subr.mxu0 0.0
  %98 = vmatpush1.msra.mxu0 0.0
  %99 = vmatprep.subr.mxu0 0.0
  %100 = vmatpush1.msra.mxu0 0.0
  %101 = vmatprep.subr.mxu0 0.0
  %102 = vmatpush1.msra.mxu0 0.0
  %103 = vmatprep.subr.mxu0 0.0
  %104 = vmatpush1.msra.mxu0 0.0
  %105 = vmatprep.subr.mxu0 0.0
  %106 = vmatpush1.msra.mxu0 0.0
  %107 = vmatprep.subr.mxu0 0.0
  %108 = vmatpush1.msra.mxu0 0.0
  %109 = vmatprep.subr.mxu0 0.0
  %110 = vmatpush1.msra.mxu0 0.0
  %111 = vmatprep.subr.mxu0 0.0
  %112 = vmatpush1.msra.mxu0 0.0
  %113 = vmatprep.subr.mxu0 0.0
  %114 = vmatpush1.msra.mxu0 0.0
  %115 = vmatprep.subr.mxu0 0.0
  %116 = vmatpush1.msra.mxu0 0.0
  %117 = vmatprep.subr.mxu0 0.0
  %118 = vmatpush1.msra.mxu0 %v85
  %119 = vmatprep.subr.mxu0 0.0
  %120 = vmatpush2.msra.mxu0 0.0
  %121 = vmatprep.subr.mxu0 0.0
  %122 = vmatpush2.msra.mxu0 0.0
  %123 = vmatprep.subr.mxu0 0.0
  %124 = vmatpush2.msra.mxu0 0.0
  %125 = vmatprep.subr.mxu0 0.0
  %126 = vmatpush2.msra.mxu0 0.0
  %127 = vmatprep.subr.mxu0 0.0
  %128 = vmatpush2.msra.mxu0 0.0
  %129 = vmatprep.subr.mxu0 0.0
  %130 = vmatpush2.msra.mxu0 0.0
  %131 = vmatprep.subr.mxu0 0.0
  %132 = vmatpush2.msra.mxu0 0.0
  %133 = vmatprep.subr.mxu0 0.0
  %134 = vmatpush2.msra.mxu0 0.0
  %135 = vmatprep.subr.mxu0 0.0
  %136 = vmatpush2.msra.mxu0 0.0
  %137 = vmatprep.subr.mxu0 0.0
  %138 = vmatpush2.msra.mxu0 0.0
  %139 = vmatprep.subr.mxu0 0.0
  %140 = vmatpush2.msra.mxu0 0.0
  %141 = vmatprep.subr.mxu0 0.0
  %142 = vmatpush2.msra.mxu0 0.0
  %143 = vmatprep.subr.mxu0 0.0
  %144 = vmatpush2.msra.mxu0 0.0
  %145 = vmatprep.subr.mxu0 0.0
  %146 = vmatpush2.msra.mxu0 0.0
  %147 = vmatprep.subr.mxu0 0.0
  %148 = vmatpush2.msra.mxu0 0.0
  %149 = vmatprep.subr.mxu0 0.0
  %150 = vmatpush2.msra.mxu0 0.0
  %151 = vmatprep.mubr.f32.mxu0 0.0
  %152 = vmatmul.mubr.f32.gmra.mxu0 %v79
  %v153 = vpop.f32.mrf.mxu0
  %v154 = vadd.f32 %v34, %v153
  %v155 = vpop.f32.mrf.mxu0
  %156 = vmatprep.mubr.f32.mxu0 0.0
  %157 = vmatmul.mubr.f32.gmra.mxu0 %v81
  %v158 = vpop.f32.mrf.mxu0
  %v159 = vadd.f32 %v34, %v158
  %v160 = vpop.f32.mrf.mxu0
  %161 = vdwg.mxu0
  %v164 = vcombine.high %v154, %v154
  %v166 = vunpack.c.l.s4 1983009808
  %v167 = vunpack.c.0.s8 %v166
  %v168 = vlaneseq
  %v169 = vshrl.u32 %v168, 7
  %v170 = vsub.s32 %v167, %v169
  %v171 = vrot.slane %v154, %v170
  %v173 = vunpack.c.l.s4 1983009808
  %v174 = vunpack.c.0.s8 %v173
  %v175 = vlaneseq
  %v176 = vshrl.u32 %v175, 7
  %v177 = vsub.s32 %v174, %v176
  %v178 = vrot.slane %v164, %v177
  %v179 = vcombine.high %v171, %v171
  %v180 = vcombine.high %v178, %v178
  %v181 = vcombine.high %v159, %v159
  %v183 = vunpack.c.l.s4 1983009808
  %v184 = vunpack.c.0.s8 %v183
  %v185 = vlaneseq
  %v186 = vshrl.u32 %v185, 7
  %v187 = vsub.s32 %v184, %v186
  %v188 = vrot.slane %v159, %v187
  %v190 = vunpack.c.l.s4 1983009808
  %v191 = vunpack.c.0.s8 %v190
  %v192 = vlaneseq
  %v193 = vshrl.u32 %v192, 7
  %v194 = vsub.s32 %v191, %v193
  %v195 = vrot.slane %v181, %v194
  %v196 = vcombine.high %v188, %v188
  %v197 = vcombine.high %v195, %v195
  %vm206 = vcmask 254976
  %207 = vst.msk [vmem:[%s5] sm:$0x3] %vm206, %v171
  %208 = vst.msk [vmem:[%s5 + $0x2] sm:$0x3] %vm206, %v179
  %209 = vst.msk [vmem:[%s5 + $0x4] sm:$0x3] %vm206, %v178
  %210 = vst.msk [vmem:[%s5 + $0x6] sm:$0x3] %vm206, %v180
  %211 = vst.msk [vmem:[%s5 + $0x8] sm:$0x3] %vm206, %v188
  %212 = vst.msk [vmem:[%s5 + $0xa] sm:$0x3] %vm206, %v196
  %213 = vst.msk [vmem:[%s5 + $0xc] sm:$0x3] %vm206, %v195
  %214 = vst.msk [vmem:[%s5 + $0xe] sm:$0x3] %vm206, %v197
  %v215 = vld [vmem:[%s3] sm:$0xff]
  %v216 = vld [vmem:[%s3 + $0x8] sm:$0xff]
  %v217 = vld [vmem:[%s3 + $0x10] sm:$0xff]
  %v218 = vld [vmem:[%s3 + $0x18] sm:$0xff]
  loop: start=0, step=1, limit=8
  $region22: #{model_forward.2} parent=0 // loop_pre_header
    _
  $region23: #{model_forward.2} parent=0 // loop_header
    %s220 = sphi 0, %s224
    %p221 = scmp.ge.s32.totalorder %s220, 8
  $region24: #{model_forward.2} parent=0 // loop_header_branch
    %223 = sbr.rel (%p221) target = $region28
  $region25: #{model_forward.2} parent=0 // loop_body
    %s225 = ssub.s32 %s220, 1
    %p226 = scmp.gt.s32.totalorder %s225, 0
    %s227 = scalar_select %p226, %s225, 0
    %s228 = smul.u32 %s227, 2
    %s229 = scalar_lea.vmem %s5, %s228
    %v230 = vld [vmem:[%s229] sm:$0x3]
    %p231 = scmp.ge.s32.totalorder %s220, 1
    %s232 = scalar_select %p231, 1, 0
    %v233 = vstv %s232
    %vm234 = vcmp.eq.s32.totalorder %v233, 1
    %v235 = vsel %vm234, %v230, 0.0
    %s236 = smul.u32 %s220, 2
    %s237 = scalar_lea.vmem %s5, %s236
    %v238 = vld [vmem:[%s237] sm:$0x3]
    %vm239 = vcmask 261120
    %v241 = vsel %vm239, %v235, 0
    %243 = vmatprep.subr.mxu0 0.0
    %244 = vmatpush1.msra.mxu0 0.0
    %245 = vmatprep.subr.mxu0 0.0
    %246 = vmatpush1.msra.mxu0 0.0
    %247 = vmatprep.subr.mxu0 0.0
    %248 = vmatpush1.msra.mxu0 0.0
    %249 = vmatprep.subr.mxu0 0.0
    %250 = vmatpush1.msra.mxu0 0.0
    %251 = vmatprep.subr.mxu0 0.0
    %252 = vmatpush1.msra.mxu0 0.0
    %253 = vmatprep.subr.mxu0 0.0
    %254 = vmatpush1.msra.mxu0 0.0
    %255 = vmatprep.subr.mxu0 0.0
    %256 = vmatpush1.msra.mxu0 0.0
    %257 = vmatprep.subr.mxu0 0.0
    %258 = vmatpush1.msra.mxu0 0.0
    %259 = vmatprep.subr.mxu0 0.0
    %260 = vmatpush1.msra.mxu0 0.0
    %261 = vmatprep.subr.mxu0 0.0
    %262 = vmatpush1.msra.mxu0 0.0
    %263 = vmatprep.subr.mxu0 0.0
    %264 = vmatpush1.msra.mxu0 0.0
    %265 = vmatprep.subr.mxu0 0.0
    %266 = vmatpush1.msra.mxu0 0.0
    %267 = vmatprep.subr.mxu0 0.0
    %268 = vmatpush1.msra.mxu0 %v218
    %269 = vmatprep.subr.mxu0 0.0
    %270 = vmatpush1.msra.mxu0 %v217
    %271 = vmatprep.subr.mxu0 0.0
    %272 = vmatpush1.msra.mxu0 %v216
    %273 = vmatprep.subr.mxu0 0.0
    %274 = vmatpush1.msra.mxu0 %v215
    %275 = vmatprep.subr.mxu0 0.0
    %276 = vmatpush2.msra.mxu0 0.0
    %277 = vmatprep.subr.mxu0 0.0
    %278 = vmatpush2.msra.mxu0 0.0
    %279 = vmatprep.subr.mxu0 0.0
    %280 = vmatpush2.msra.mxu0 0.0
    %281 = vmatprep.subr.mxu0 0.0
    %282 = vmatpush2.msra.mxu0 0.0
    %283 = vmatprep.subr.mxu0 0.0
    %284 = vmatpush2.msra.mxu0 0.0
    %285 = vmatprep.subr.mxu0 0.0
    %286 = vmatpush2.msra.mxu0 0.0
    %287 = vmatprep.subr.mxu0 0.0
    %288 = vmatpush2.msra.mxu0 0.0
    %289 = vmatprep.subr.mxu0 0.0
    %290 = vmatpush2.msra.mxu0 0.0
    %291 = vmatprep.subr.mxu0 0.0
    %292 = vmatpush2.msra.mxu0 0.0
    %293 = vmatprep.subr.mxu0 0.0
    %294 = vmatpush2.msra.mxu0 0.0
    %295 = vmatprep.subr.mxu0 0.0
    %296 = vmatpush2.msra.mxu0 0.0
    %297 = vmatprep.subr.mxu0 0.0
    %298 = vmatpush2.msra.mxu0 0.0
    %299 = vmatprep.subr.mxu0 0.0
    %300 = vmatpush2.msra.mxu0 0.0
    %301 = vmatprep.subr.mxu0 0.0
    %302 = vmatpush2.msra.mxu0 0.0
    %303 = vmatprep.subr.mxu0 0.0
    %304 = vmatpush2.msra.mxu0 0.0
    %305 = vmatprep.subr.mxu0 0.0
    %306 = vmatpush2.msra.mxu0 0.0
    %307 = vmatprep.mubr.f32.mxu0 0.0
    %308 = vmatmul.mubr.f32.gmra.mxu0 %v241
    %v309 = vpop.f32.mrf.mxu0
    %v310 = vadd.f32 0.0, %v309
    %v311 = vpop.f32.mrf.mxu0
    %312 = vdwg.mxu0
    %v313 = vadd.f32 %v238, %v310
    %v314 = vtanh.pop %v313
    %315 = vst.msk [vmem:[%s237] sm:$0x3] %vm206, %v314
  $region26: #{model_forward.2} parent=0 // loop_footer
    %s224 = sadd.s32 1, %s220
  $region27: #{model_forward.2} parent=0 // loop_footer_branch
    %219 = sbr.rel target = $region23
  $region28: #{model_forward.2} parent=0 // loop_exit
    _
  %v316 = vld [vmem:[%s5] sm:$0x3]
  %v317 = vld [vmem:[%s5 + $0x2] sm:$0x3]
  %v318 = vld [vmem:[%s5 + $0x4] sm:$0x3]
  %v319 = vld [vmem:[%s5 + $0x6] sm:$0x3]
  %v320 = vld [vmem:[%s5 + $0x8] sm:$0x3]
  %v321 = vld [vmem:[%s5 + $0xa] sm:$0x3]
  %v322 = vld [vmem:[%s5 + $0xc] sm:$0x3]
  %v323 = vld [vmem:[%s5 + $0xe] sm:$0x3]
  %v324 = vld [vmem:[%s2] sm:$0xff]
  %v325 = vld [vmem:[%s2 + $0x8] sm:$0xff]
  %v326 = vld [vmem:[%s2 + $0x10] sm:$0xff]
  %v327 = vld [vmem:[%s2 + $0x18] sm:$0xff]
  %s328 = scalar_lea.vmem %s4, 1
  %v329 = vld [vmem:[%s328] sm:$0x1]
  %v331 = vlaneseq
  %v332 = vshrl.u32 %v331, 7
  %v333 = vsub.s32 0, %v332
  %v334 = vrot.slane %v329, %v333
  %v344 = vcombine.low %v316, %v317
  %v345 = vcombine.low %v318, %v319
  %v347 = vunpack.c.l.s4 1983009808
  %v348 = vunpack.c.0.s8 %v347
  %v349 = vlaneseq
  %v350 = vshrl.u32 %v349, 7
  %v351 = vsub.s32 %v348, %v350
  %v352 = vrot.slane %v344, %v351
  %v354 = vunpack.c.l.s4 1983009808
  %v355 = vunpack.c.0.s8 %v354
  %v356 = vlaneseq
  %v357 = vshrl.u32 %v356, 7
  %v358 = vsub.s32 %v355, %v357
  %v359 = vrot.slane %v345, %v358
  %v360 = vcombine.low %v352, %v359
  %v361 = vcombine.low %v320, %v321
  %v362 = vcombine.low %v322, %v323
  %v364 = vunpack.c.l.s4 1983009808
  %v365 = vunpack.c.0.s8 %v364
  %v366 = vlaneseq
  %v367 = vshrl.u32 %v366, 7
  %v368 = vsub.s32 %v365, %v367
  %v369 = vrot.slane %v361, %v368
  %v371 = vunpack.c.l.s4 1983009808
  %v372 = vunpack.c.0.s8 %v371
  %v373 = vlaneseq
  %v374 = vshrl.u32 %v373, 7
  %v375 = vsub.s32 %v372, %v374
  %v376 = vrot.slane %v362, %v375
  %v377 = vcombine.low %v369, %v376
  %vm378 = vcmask 261120
  %v379 = vsel %vm378, %v360, 0
  %v381 = vsel %vm378, %v377, 0
  %383 = vmatprep.subr.mxu0 0.0
  %384 = vmatpush1.msra.mxu0 0.0
  %385 = vmatprep.subr.mxu0 0.0
  %386 = vmatpush1.msra.mxu0 0.0
  %387 = vmatprep.subr.mxu0 0.0
  %388 = vmatpush1.msra.mxu0 0.0
  %389 = vmatprep.subr.mxu0 0.0
  %390 = vmatpush1.msra.mxu0 0.0
  %391 = vmatprep.subr.mxu0 0.0
  %392 = vmatpush1.msra.mxu0 0.0
  %393 = vmatprep.subr.mxu0 0.0
  %394 = vmatpush1.msra.mxu0 0.0
  %395 = vmatprep.subr.mxu0 0.0
  %396 = vmatpush1.msra.mxu0 0.0
  %397 = vmatprep.subr.mxu0 0.0
  %398 = vmatpush1.msra.mxu0 0.0
  %399 = vmatprep.subr.mxu0 0.0
  %400 = vmatpush1.msra.mxu0 0.0
  %401 = vmatprep.subr.mxu0 0.0
  %402 = vmatpush1.msra.mxu0 0.0
  %403 = vmatprep.subr.mxu0 0.0
  %404 = vmatpush1.msra.mxu0 0.0
  %405 = vmatprep.subr.mxu0 0.0
  %406 = vmatpush1.msra.mxu0 0.0
  %407 = vmatprep.subr.mxu0 0.0
  %408 = vmatpush1.msra.mxu0 %v327
  %409 = vmatprep.subr.mxu0 0.0
  %410 = vmatpush1.msra.mxu0 %v326
  %411 = vmatprep.subr.mxu0 0.0
  %412 = vmatpush1.msra.mxu0 %v325
  %413 = vmatprep.subr.mxu0 0.0
  %414 = vmatpush1.msra.mxu0 %v324
  %415 = vmatprep.subr.mxu0 0.0
  %416 = vmatpush2.msra.mxu0 0.0
  %417 = vmatprep.subr.mxu0 0.0
  %418 = vmatpush2.msra.mxu0 0.0
  %419 = vmatprep.subr.mxu0 0.0
  %420 = vmatpush2.msra.mxu0 0.0
  %421 = vmatprep.subr.mxu0 0.0
  %422 = vmatpush2.msra.mxu0 0.0
  %423 = vmatprep.subr.mxu0 0.0
  %424 = vmatpush2.msra.mxu0 0.0
  %425 = vmatprep.subr.mxu0 0.0
  %426 = vmatpush2.msra.mxu0 0.0
  %427 = vmatprep.subr.mxu0 0.0
  %428 = vmatpush2.msra.mxu0 0.0
  %429 = vmatprep.subr.mxu0 0.0
  %430 = vmatpush2.msra.mxu0 0.0
  %431 = vmatprep.subr.mxu0 0.0
  %432 = vmatpush2.msra.mxu0 0.0
  %433 = vmatprep.subr.mxu0 0.0
  %434 = vmatpush2.msra.mxu0 0.0
  %435 = vmatprep.subr.mxu0 0.0
  %436 = vmatpush2.msra.mxu0 0.0
  %437 = vmatprep.subr.mxu0 0.0
  %438 = vmatpush2.msra.mxu0 0.0
  %439 = vmatprep.subr.mxu0 0.0
  %440 = vmatpush2.msra.mxu0 0.0
  %441 = vmatprep.subr.mxu0 0.0
  %442 = vmatpush2.msra.mxu0 0.0
  %443 = vmatprep.subr.mxu0 0.0
  %444 = vmatpush2.msra.mxu0 0.0
  %445 = vmatprep.subr.mxu0 0.0
  %446 = vmatpush2.msra.mxu0 0.0
  %447 = vmatprep.mubr.f32.mxu0 0.0
  %448 = vmatmul.mubr.f32.gmra.mxu0 %v379
  %v449 = vpop.f32.mrf.mxu0
  %v450 = vadd.f32 %v334, %v449
  %v451 = vpop.f32.mrf.mxu0
  %452 = vmatprep.mubr.f32.mxu0 0.0
  %453 = vmatmul.mubr.f32.gmra.mxu0 %v381
  %v454 = vpop.f32.mrf.mxu0
  %v455 = vadd.f32 %v334, %v454
  %v456 = vpop.f32.mrf.mxu0
  %457 = vdwg.mxu0
  %v460 = vcombine.high %v450, %v450
  %v462 = vunpack.c.l.s4 1983009808
  %v463 = vunpack.c.0.s8 %v462
  %v464 = vlaneseq
  %v465 = vshrl.u32 %v464, 7
  %v466 = vsub.s32 %v463, %v465
  %v467 = vrot.slane %v450, %v466
  %v469 = vunpack.c.l.s4 1983009808
  %v470 = vunpack.c.0.s8 %v469
  %v471 = vlaneseq
  %v472 = vshrl.u32 %v471, 7
  %v473 = vsub.s32 %v470, %v472
  %v474 = vrot.slane %v460, %v473
  %v475 = vcombine.high %v467, %v467
  %v476 = vcombine.high %v474, %v474
  %v477 = vcombine.high %v455, %v455
  %v479 = vunpack.c.l.s4 1983009808
  %v480 = vunpack.c.0.s8 %v479
  %v481 = vlaneseq
  %v482 = vshrl.u32 %v481, 7
  %v483 = vsub.s32 %v480, %v482
  %v484 = vrot.slane %v455, %v483
  %v486 = vunpack.c.l.s4 1983009808
  %v487 = vunpack.c.0.s8 %v486
  %v488 = vlaneseq
  %v489 = vshrl.u32 %v488, 7
  %v490 = vsub.s32 %v487, %v489
  %v491 = vrot.slane %v477, %v490
  %v492 = vcombine.high %v484, %v484
  %v493 = vcombine.high %v491, %v491
  %s502 = scalar_lea.vmem %s5, 16
  %503 = vst.msk [vmem:[%s502] sm:$0x3] %vm206, %v467
  %504 = vst.msk [vmem:[%s502 + $0x2] sm:$0x3] %vm206, %v475
  %505 = vst.msk [vmem:[%s502 + $0x4] sm:$0x3] %vm206, %v474
  %506 = vst.msk [vmem:[%s502 + $0x6] sm:$0x3] %vm206, %v476
  %507 = vst.msk [vmem:[%s502 + $0x8] sm:$0x3] %vm206, %v484
  %508 = vst.msk [vmem:[%s502 + $0xa] sm:$0x3] %vm206, %v492
  %509 = vst.msk [vmem:[%s502 + $0xc] sm:$0x3] %vm206, %v491
  %510 = vst.msk [vmem:[%s502 + $0xe] sm:$0x3] %vm206, %v493
  %s511 = scalar_lea.vmem %s3, 32
  %v512 = vld [vmem:[%s511] sm:$0xff]
  %v513 = vld [vmem:[%s511 + $0x8] sm:$0xff]
  %v514 = vld [vmem:[%s511 + $0x10] sm:$0xff]
  %v515 = vld [vmem:[%s511 + $0x18] sm:$0xff]
  loop: start=0, step=1, limit=8
  $region29: #{model_forward.2} parent=0 // loop_pre_header
    _
  $region30: #{model_forward.2} parent=0 // loop_header
    %s517 = sphi 0, %s521
    %p518 = scmp.ge.s32.totalorder %s517, 8
  $region31: #{model_forward.2} parent=0 // loop_header_branch
    %520 = sbr.rel (%p518) target = $region35
  $region32: #{model_forward.2} parent=0 // loop_body
    %s522 = ssub.s32 %s517, 2
    %p523 = scmp.gt.s32.totalorder %s522, 0
    %s524 = scalar_select %p523, %s522, 0
    %s525 = smul.u32 %s524, 2
    %s526 = sadd.s32 %s525, 16
    %s527 = scalar_lea.vmem %s5, %s526
    %v528 = vld [vmem:[%s527] sm:$0x3]
    %p529 = scmp.ge.s32.totalorder %s517, 2
    %s530 = scalar_select %p529, 1, 0
    %v531 = vstv %s530
    %vm532 = vcmp.eq.s32.totalorder %v531, 1
    %v533 = vsel %vm532, %v528, 0.0
    %s534 = smul.u32 %s517, 2
    %s535 = sadd.s32 %s534, 16
    %s536 = scalar_lea.vmem %s5, %s535
    %v537 = vld [vmem:[%s536] sm:$0x3]
    %v539 = vsel %vm378, %v533, 0
    %541 = vmatprep.subr.mxu0 0.0
    %542 = vmatpush1.msra.mxu0 0.0
    %543 = vmatprep.subr.mxu0 0.0
    %544 = vmatpush1.msra.mxu0 0.0
    %545 = vmatprep.subr.mxu0 0.0
    %546 = vmatpush1.msra.mxu0 0.0
    %547 = vmatprep.subr.mxu0 0.0
    %548 = vmatpush1.msra.mxu0 0.0
    %549 = vmatprep.subr.mxu0 0.0
    %550 = vmatpush1.msra.mxu0 0.0
    %551 = vmatprep.subr.mxu0 0.0
    %552 = vmatpush1.msra.mxu0 0.0
    %553 = vmatprep.subr.mxu0 0.0
    %554 = vmatpush1.msra.mxu0 0.0
    %555 = vmatprep.subr.mxu0 0.0
    %556 = vmatpush1.msra.mxu0 0.0
    %557 = vmatprep.subr.mxu0 0.0
    %558 = vmatpush1.msra.mxu0 0.0
    %559 = vmatprep.subr.mxu0 0.0
    %560 = vmatpush1.msra.mxu0 0.0
    %561 = vmatprep.subr.mxu0 0.0
    %562 = vmatpush1.msra.mxu0 0.0
    %563 = vmatprep.subr.mxu0 0.0
    %564 = vmatpush1.msra.mxu0 0.0
    %565 = vmatprep.subr.mxu0 0.0
    %566 = vmatpush1.msra.mxu0 %v515
    %567 = vmatprep.subr.mxu0 0.0
    %568 = vmatpush1.msra.mxu0 %v514
    %569 = vmatprep.subr.mxu0 0.0
    %570 = vmatpush1.msra.mxu0 %v513
    %571 = vmatprep.subr.mxu0 0.0
    %572 = vmatpush1.msra.mxu0 %v512
    %573 = vmatprep.subr.mxu0 0.0
    %574 = vmatpush2.msra.mxu0 0.0
    %575 = vmatprep.subr.mxu0 0.0
    %576 = vmatpush2.msra.mxu0 0.0
    %577 = vmatprep.subr.mxu0 0.0
    %578 = vmatpush2.msra.mxu0 0.0
    %579 = vmatprep.subr.mxu0 0.0
    %580 = vmatpush2.msra.mxu0 0.0
    %581 = vmatprep.subr.mxu0 0.0
    %582 = vmatpush2.msra.mxu0 0.0
    %583 = vmatprep.subr.mxu0 0.0
    %584 = vmatpush2.msra.mxu0 0.0
    %585 = vmatprep.subr.mxu0 0.0
    %586 = vmatpush2.msra.mxu0 0.0
    %587 = vmatprep.subr.mxu0 0.0
    %588 = vmatpush2.msra.mxu0 0.0
    %589 = vmatprep.subr.mxu0 0.0
    %590 = vmatpush2.msra.mxu0 0.0
    %591 = vmatprep.subr.mxu0 0.0
    %592 = vmatpush2.msra.mxu0 0.0
    %593 = vmatprep.subr.mxu0 0.0
    %594 = vmatpush2.msra.mxu0 0.0
    %595 = vmatprep.subr.mxu0 0.0
    %596 = vmatpush2.msra.mxu0 0.0
    %597 = vmatprep.subr.mxu0 0.0
    %598 = vmatpush2.msra.mxu0 0.0
    %599 = vmatprep.subr.mxu0 0.0
    %600 = vmatpush2.msra.mxu0 0.0
    %601 = vmatprep.subr.mxu0 0.0
    %602 = vmatpush2.msra.mxu0 0.0
    %603 = vmatprep.subr.mxu0 0.0
    %604 = vmatpush2.msra.mxu0 0.0
    %605 = vmatprep.mubr.f32.mxu0 0.0
    %606 = vmatmul.mubr.f32.gmra.mxu0 %v539
    %v607 = vpop.f32.mrf.mxu0
    %v608 = vadd.f32 0.0, %v607
    %v609 = vpop.f32.mrf.mxu0
    %610 = vdwg.mxu0
    %v611 = vadd.f32 %v537, %v608
    %v612 = vtanh.pop %v611
    %613 = vst.msk [vmem:[%s536] sm:$0x3] %vm206, %v612
  $region33: #{model_forward.2} parent=0 // loop_footer
    %s521 = sadd.s32 1, %s517
  $region34: #{model_forward.2} parent=0 // loop_footer_branch
    %516 = sbr.rel target = $region30
  $region35: #{model_forward.2} parent=0 // loop_exit
    _
  // Predicated region
  $region36: #{model_forward.2} parent=0 // pred_check
    _
  $region37: #{model_forward.2} parent=0 // pred_check_branch
    %615 = sbr.rel (0) target = $region39
  $region38: #{model_forward.2} parent=0 // pred_region
    _
  $region39: #{model_forward.2} parent=0 // pred_fallthru
    _
  // Predicated region
  $region40: #{model_forward.2} parent=0 // pred_check
    _
  $region41: #{model_forward.2} parent=0 // pred_check_branch
    %617 = sbr.rel (0) target = $region43
  $region42: #{model_forward.2} parent=0 // pred_region
    _
  $region43: #{model_forward.2} parent=0 // pred_fallthru
    _

// kernel: model_forward.3
$region0: #{model_forward.3}
  #allocation0 [shape = 'u32[]', space=smem, size = 0x4, offset = 0x4, fixed_abs, tag = 'smem constant byte address 0x4 - core index']
  #allocation1 [shape = 'u32[144,128]{1,0:T(1,128)}', space=vmem, size = 0x12000, scoped, tag = 'internal scratch']
  %s0 = inlined_call_operand.vmem [shape: f32[2,16,32], index: 0, kind: input, shape index: {}]
  %s1 = inlined_call_operand.vmem [shape: f32[32,132], index: 1, kind: input, shape index: {}]
  %s2 = inlined_call_operand.vmem [shape: f32[1,128], index: 2, kind: input, shape index: {}]
  %s3 = inlined_call_operand.vmem [shape: f32[1,128,528], index: 3, kind: input, shape index: {}]
  %s4 = inlined_call_operand.vmem [shape: f32[1,1,128], index: 4, kind: input, shape index: {}]
  %s5 = inlined_call_operand.vmem [shape: f32[32,128], index: 5, kind: input, shape index: {}]
  %s6 = inlined_call_operand.vmem [shape: f32[128,128], index: 6, kind: input, shape index: {}]
  %s7 = inlined_call_operand.vmem [shape: f32[1,128], index: 7, kind: input, shape index: {}]
  %s8 = inlined_call_operand.vmem [shape: f32[128,4], index: 8, kind: input, shape index: {}]
  %s9 = inlined_call_operand.vmem [shape: f32[4,128], index: 9, kind: input, shape index: {}]
  %s10 = inlined_call_operand.vmem [shape: f32[16,128], index: 10, kind: output, shape index: {0}]
  %s11 = inlined_call_operand.vmem [shape: f32[16,8], index: 11, kind: output, shape index: {1}]
  %12 = xla_tuple %s10, %s11
  %s13 = sld [smem:[#allocation0]]
  $region119: #{model_forward.3} parent=0
    _
  %s15 = ssub.s32 1, %s13
  %s16 = scalar_select 0, %s15, %s13
  $region1: #{model_forward.3} parent=0
    #allocation2 [shape = 'u8[16384]{0}', space=vmem, size = 0x4000, scoped, tag = 'input window, operand 0']
    loop: start=0, step=1, limit=4
    $region2: #{model_forward.3} parent=1 // loop_pre_header
      _
    $region3: #{model_forward.3} parent=1 // loop_header
      %s18 = sphi 0, %s22
      %p19 = scmp.ge.s32.totalorder %s18, 4
      %s28 = sphi 0, %s30
      %s31 = sphi 0, %s28
      %s32 = sphi 0, %s31
      %s48 = sphi 0, %s32
      %s52 = sphi 0, %s52
      %s54 = sphi 0, %s52
      %s55 = sphi 0, %s54
      %s69 = sphi 0, %s55
      %s73 = sphi 0, %s73
      %s75 = sphi 0, %s73
      %s76 = sphi 0, %s75
      %s90 = sphi 0, %s76
      %s94 = sphi 0, %s94
      %s96 = sphi 0, %s94
      %s97 = sphi 0, %s96
      %s111 = sphi 0, %s97
      %s115 = sphi 0, %s115
      %s117 = sphi 0, %s115
      %s118 = sphi 0, %s117
      %s132 = sphi 0, %s118
      %s136 = sphi 0, %s136
      %s138 = sphi 0, %s136
      %s139 = sphi 0, %s138
      %s153 = sphi 0, %s139
      %s157 = sphi 0, %s157
      %s159 = sphi 0, %s157
      %s160 = sphi 0, %s159
      %s174 = sphi 0, %s160
      %s178 = sphi 0, %s178
      %s180 = sphi 0, %s178
      %s181 = sphi 0, %s180
      %s195 = sphi 0, %s181
      %s199 = sphi 0, %s199
      %s201 = sphi 0, %s199
      %s202 = sphi 0, %s201
      %s216 = sphi 0, %s202
      %s220 = sphi 0, %s220
      %s222 = sphi 0, %s220
      %s223 = sphi 0, %s222
      %s237 = sphi 0, %s223
      %s243 = sphi 0, %s245
      %s246 = sphi 0, %s243
      %s247 = sphi 0, %s246
      %s263 = sphi 0, %s247
      %s269 = sphi 0, %s271
      %s272 = sphi 0, %s269
      %s273 = sphi 0, %s272
      %s289 = sphi 0, %s273
    $region4: #{model_forward.3} parent=1 // loop_header_branch
      %21 = sbr.rel (%p19) target = $region8
    $region5: #{model_forward.3} parent=1 // loop_body
      %s23 = ssub.s32 %s18, 1
      %s24 = ssub.s32 %s18, 2
      %s25 = sadd.s32 %s18, 1
      %s26 = ssub.s32 %s18, %s25
      %p27 = scmp.eq.s32.totalorder %s26, 0
      %s29 = sadd.s32 %s28, 1
      %s30 = scalar_select %p27, %s28, %s29
      %p33 = pneg %p27
      %p34 = scmp.eq.s32.totalorder %s18, 1
      %p35 = por %p33, %p34
      %p36 = scmp.ne.s32.totalorder %s28, %s31
      %p37 = scmp.eq.s32.totalorder %s18, 0
      %p38 = por %p36, %p37
      %p39 = scmp.ne.s32.totalorder %s28, %s31
      %p40 = scmp.eq.s32.totalorder %s23, 1
      %p41 = por %p39, %p40
      %p42 = scmp.ne.s32.totalorder %s31, %s32
      %p43 = scmp.eq.s32.totalorder %s23, 0
      %p44 = por %p42, %p43
      %p45 = scmp.ne.s32.totalorder %s31, %s32
      %p46 = scmp.eq.s32.totalorder %s24, 1
      %p47 = por %p45, %p46
      %p49 = scmp.ne.s32.totalorder %s32, %s48
      %p50 = scmp.eq.s32.totalorder %s24, 0
      %p51 = por %p49, %p50
      %s53 = sadd.s32 %s52, 1
      %p56 = scmp.eq.s32.totalorder %s18, 1
      %p57 = scmp.ne.s32.totalorder %s52, %s54
      %p58 = scmp.eq.s32.totalorder %s18, 0
      %p59 = por %p57, %p58
      %p60 = scmp.ne.s32.totalorder %s52, %s54
      %p61 = scmp.eq.s32.totalorder %s23, 1
      %p62 = por %p60, %p61
      %p63 = scmp.ne.s32.totalorder %s54, %s55
      %p64 = scmp.eq.s32.totalorder %s23, 0
      %p65 = por %p63, %p64
      %p66 = scmp.ne.s32.totalorder %s54, %s55
      %p67 = scmp.eq.s32.totalorder %s24, 1
      %p68 = por %p66, %p67
      %p70 = scmp.ne.s32.totalorder %s55, %s69
      %p71 = scmp.eq.s32.totalorder %s24, 0
      %p72 = por %p70, %p71
      %s74 = sadd.s32 %s73, 1
      %p77 = scmp.eq.s32.totalorder %s18, 1
      %p78 = scmp.ne.s32.totalorder %s73, %s75
      %p79 = scmp.eq.s32.totalorder %s18, 0
      %p80 = por %p78, %p79
      %p81 = scmp.ne.s32.totalorder %s73, %s75
      %p82 = scmp.eq.s32.totalorder %s23, 1
      %p83 = por %p81, %p82
      %p84 = scmp.ne.s32.totalorder %s75, %s76
      %p85 = scmp.eq.s32.totalorder %s23, 0
      %p86 = por %p84, %p85
      %p87 = scmp.ne.s32.totalorder %s75, %s76
      %p88 = scmp.eq.s32.totalorder %s24, 1
      %p89 = por %p87, %p88
      %p91 = scmp.ne.s32.totalorder %s76, %s90
      %p92 = scmp.eq.s32.totalorder %s24, 0
      %p93 = por %p91, %p92
      %s95 = sadd.s32 %s94, 1
      %p98 = scmp.eq.s32.totalorder %s18, 1
      %p99 = scmp.ne.s32.totalorder %s94, %s96
      %p100 = scmp.eq.s32.totalorder %s18, 0
      %p101 = por %p99, %p100
      %p102 = scmp.ne.s32.totalorder %s94, %s96
      %p103 = scmp.eq.s32.totalorder %s23, 1
      %p104 = por %p102, %p103
      %p105 = scmp.ne.s32.totalorder %s96, %s97
      %p106 = scmp.eq.s32.totalorder %s23, 0
      %p107 = por %p105, %p106
      %p108 = scmp.ne.s32.totalorder %s96, %s97
      %p109 = scmp.eq.s32.totalorder %s24, 1
      %p110 = por %p108, %p109
      %p112 = scmp.ne.s32.totalorder %s97, %s111
      %p113 = scmp.eq.s32.totalorder %s24, 0
      %p114 = por %p112, %p113
      %s116 = sadd.s32 %s115, 1
      %p119 = scmp.eq.s32.totalorder %s18, 1
      %p120 = scmp.ne.s32.totalorder %s115, %s117
      %p121 = scmp.eq.s32.totalorder %s18, 0
      %p122 = por %p120, %p121
      %p123 = scmp.ne.s32.totalorder %s115, %s117
      %p124 = scmp.eq.s32.totalorder %s23, 1
      %p125 = por %p123, %p124
      %p126 = scmp.ne.s32.totalorder %s117, %s118
      %p127 = scmp.eq.s32.totalorder %s23, 0
      %p128 = por %p126, %p127
      %p129 = scmp.ne.s32.totalorder %s117, %s118
      %p130 = scmp.eq.s32.totalorder %s24, 1
      %p131 = por %p129, %p130
      %p133 = scmp.ne.s32.totalorder %s118, %s132
      %p134 = scmp.eq.s32.totalorder %s24, 0
      %p135 = por %p133, %p134
      %s137 = sadd.s32 %s136, 1
      %p140 = scmp.eq.s32.totalorder %s18, 1
      %p141 = scmp.ne.s32.totalorder %s136, %s138
      %p142 = scmp.eq.s32.totalorder %s18, 0
      %p143 = por %p141, %p142
      %p144 = scmp.ne.s32.totalorder %s136, %s138
      %p145 = scmp.eq.s32.totalorder %s23, 1
      %p146 = por %p144, %p145
      %p147 = scmp.ne.s32.totalorder %s138, %s139
      %p148 = scmp.eq.s32.totalorder %s23, 0
      %p149 = por %p147, %p148
      %p150 = scmp.ne.s32.totalorder %s138, %s139
      %p151 = scmp.eq.s32.totalorder %s24, 1
      %p152 = por %p150, %p151
      %p154 = scmp.ne.s32.totalorder %s139, %s153
      %p155 = scmp.eq.s32.totalorder %s24, 0
      %p156 = por %p154, %p155
      %s158 = sadd.s32 %s157, 1
      %p161 = scmp.eq.s32.totalorder %s18, 1
      %p162 = scmp.ne.s32.totalorder %s157, %s159
      %p163 = scmp.eq.s32.totalorder %s18, 0
      %p164 = por %p162, %p163
      %p165 = scmp.ne.s32.totalorder %s157, %s159
      %p166 = scmp.eq.s32.totalorder %s23, 1
      %p167 = por %p165, %p166
      %p168 = scmp.ne.s32.totalorder %s159, %s160
      %p169 = scmp.eq.s32.totalorder %s23, 0
      %p170 = por %p168, %p169
      %p171 = scmp.ne.s32.totalorder %s159, %s160
      %p172 = scmp.eq.s32.totalorder %s24, 1
      %p173 = por %p171, %p172
      %p175 = scmp.ne.s32.totalorder %s160, %s174
      %p176 = scmp.eq.s32.totalorder %s24, 0
      %p177 = por %p175, %p176
      %s179 = sadd.s32 %s178, 1
      %p182 = scmp.eq.s32.totalorder %s18, 1
      %p183 = scmp.ne.s32.totalorder %s178, %s180
      %p184 = scmp.eq.s32.totalorder %s18, 0
      %p185 = por %p183, %p184
      %p186 = scmp.ne.s32.totalorder %s178, %s180
      %p187 = scmp.eq.s32.totalorder %s23, 1
      %p188 = por %p186, %p187
      %p189 = scmp.ne.s32.totalorder %s180, %s181
      %p190 = scmp.eq.s32.totalorder %s23, 0
      %p191 = por %p189, %p190
      %p192 = scmp.ne.s32.totalorder %s180, %s181
      %p193 = scmp.eq.s32.totalorder %s24, 1
      %p194 = por %p192, %p193
      %p196 = scmp.ne.s32.totalorder %s181, %s195
      %p197 = scmp.eq.s32.totalorder %s24, 0
      %p198 = por %p196, %p197
      %s200 = sadd.s32 %s199, 1
      %p203 = scmp.eq.s32.totalorder %s18, 1
      %p204 = scmp.ne.s32.totalorder %s199, %s201
      %p205 = scmp.eq.s32.totalorder %s18, 0
      %p206 = por %p204, %p205
      %p207 = scmp.ne.s32.totalorder %s199, %s201
      %p208 = scmp.eq.s32.totalorder %s23, 1
      %p209 = por %p207, %p208
      %p210 = scmp.ne.s32.totalorder %s201, %s202
      %p211 = scmp.eq.s32.totalorder %s23, 0
      %p212 = por %p210, %p211
      %p213 = scmp.ne.s32.totalorder %s201, %s202
      %p214 = scmp.eq.s32.totalorder %s24, 1
      %p215 = por %p213, %p214
      %p217 = scmp.ne.s32.totalorder %s202, %s216
      %p218 = scmp.eq.s32.totalorder %s24, 0
      %p219 = por %p217, %p218
      %s221 = sadd.s32 %s220, 1
      %p224 = scmp.eq.s32.totalorder %s18, 1
      %p225 = scmp.ne.s32.totalorder %s220, %s222
      %p226 = scmp.eq.s32.totalorder %s18, 0
      %p227 = por %p225, %p226
      %p228 = scmp.ne.s32.totalorder %s220, %s222
      %p229 = scmp.eq.s32.totalorder %s23, 1
      %p230 = por %p228, %p229
      %p231 = scmp.ne.s32.totalorder %s222, %s223
      %p232 = scmp.eq.s32.totalorder %s23, 0
      %p233 = por %p231, %p232
      %p234 = scmp.ne.s32.totalorder %s222, %s223
      %p235 = scmp.eq.s32.totalorder %s24, 1
      %p236 = por %p234, %p235
      %p238 = scmp.ne.s32.totalorder %s223, %s237
      %p239 = scmp.eq.s32.totalorder %s24, 0
      %p240 = por %p238, %p239
      %s241 = ssub.s32 %s18, %s25
      %p242 = scmp.eq.s32.totalorder %s241, 0
      %s244 = sadd.s32 %s243, 1
      %s245 = scalar_select %p242, %s243, %s244
      %p248 = pneg %p242
      %p249 = scmp.eq.s32.totalorder %s18, 1
      %p250 = por %p248, %p249
      %p251 = scmp.ne.s32.totalorder %s243, %s246
      %p252 = scmp.eq.s32.totalorder %s18, 0
      %p253 = por %p251, %p252
      %p254 = scmp.ne.s32.totalorder %s243, %s246
      %p255 = scmp.eq.s32.totalorder %s23, 1
      %p256 = por %p254, %p255
      %p257 = scmp.ne.s32.totalorder %s246, %s247
      %p258 = scmp.eq.s32.totalorder %s23, 0
      %p259 = por %p257, %p258
      %p260 = scmp.ne.s32.totalorder %s246, %s247
      %p261 = scmp.eq.s32.totalorder %s24, 1
      %p262 = por %p260, %p261
      %p264 = scmp.ne.s32.totalorder %s247, %s263
      %p265 = scmp.eq.s32.totalorder %s24, 0
      %p266 = por %p264, %p265
      %s267 = ssub.s32 %s18, %s25
      %p268 = scmp.eq.s32.totalorder %s267, 0
      %s270 = sadd.s32 %s269, 1
      %s271 = scalar_select %p268, %s269, %s270
      %p274 = pneg %p268
      %p275 = scmp.eq.s32.totalorder %s18, 1
      %p276 = por %p274, %p275
      %p277 = scmp.ne.s32.totalorder %s269, %s272
      %p278 = scmp.eq.s32.totalorder %s18, 0
      %p279 = por %p277, %p278
      %p280 = scmp.ne.s32.totalorder %s269, %s272
      %p281 = scmp.eq.s32.totalorder %s23, 1
      %p282 = por %p280, %p281
      %p283 = scmp.ne.s32.totalorder %s272, %s273
      %p284 = scmp.eq.s32.totalorder %s23, 0
      %p285 = por %p283, %p284
      %p286 = scmp.ne.s32.totalorder %s272, %s273
      %p287 = scmp.eq.s32.totalorder %s24, 1
      %p288 = por %p286, %p287
      %p290 = scmp.ne.s32.totalorder %s273, %s289
      %p291 = scmp.eq.s32.totalorder %s24, 0
      %p292 = por %p290, %p291
      %p293 = scmp.le.s32.totalorder 1, %s18
      %p294 = scmp.lt.s32.totalorder %s18, 3
      %p295 = pnand %p293, %p294
      %p296 = pneg %p295
      // Predicated region
      $region9: #{model_forward.3} parent=5 // pred_check
        _
      $region10: #{model_forward.3} parent=5 // pred_check_branch
        %298 = sbr.rel (%p295) target = $region12
      $region11: #{model_forward.3} parent=5 // pred_region
        %s299 = ssub.s32 %s18, 1
        // Predicated region
        $region13: #{model_forward.3} parent=11 // pred_check
          %p300 = pneg %p65
        $region14: #{model_forward.3} parent=11 // pred_check_branch
          %302 = sbr.rel (%p300) target = $region16
        $region15: #{model_forward.3} parent=11 // pred_region
          _
        $region16: #{model_forward.3} parent=11 // pred_fallthru
          _
        // Predicated region
        $region17: #{model_forward.3} parent=11 // pred_check
          %p303 = pneg %p86
        $region18: #{model_forward.3} parent=11 // pred_check_branch
          %305 = sbr.rel (%p303) target = $region20
        $region19: #{model_forward.3} parent=11 // pred_region
          _
        $region20: #{model_forward.3} parent=11 // pred_fallthru
          _
        // Predicated region
        $region21: #{model_forward.3} parent=11 // pred_check
          %p306 = pneg %p107
        $region22: #{model_forward.3} parent=11 // pred_check_branch
          %308 = sbr.rel (%p306) target = $region24
        $region23: #{model_forward.3} parent=11 // pred_region
          _
        $region24: #{model_forward.3} parent=11 // pred_fallthru
          _
        // Predicated region
        $region25: #{model_forward.3} parent=11 // pred_check
          %p309 = pneg %p128
        $region26: #{model_forward.3} parent=11 // pred_check_branch
          %311 = sbr.rel (%p309) target = $region28
        $region27: #{model_forward.3} parent=11 // pred_region
          _
        $region28: #{model_forward.3} parent=11 // pred_fallthru
          _
        // Predicated region
        $region29: #{model_forward.3} parent=11 // pred_check
          %p312 = pneg %p149
        $region30: #{model_forward.3} parent=11 // pred_check_branch
          %314 = sbr.rel (%p312) target = $region32
        $region31: #{model_forward.3} parent=11 // pred_region
          _
        $region32: #{model_forward.3} parent=11 // pred_fallthru
          _
        // Predicated region
        $region33: #{model_forward.3} parent=11 // pred_check
          %p315 = pneg %p170
        $region34: #{model_forward.3} parent=11 // pred_check_branch
          %317 = sbr.rel (%p315) target = $region36
        $region35: #{model_forward.3} parent=11 // pred_region
          _
        $region36: #{model_forward.3} parent=11 // pred_fallthru
          _
        // Predicated region
        $region37: #{model_forward.3} parent=11 // pred_check
          %p318 = pneg %p191
        $region38: #{model_forward.3} parent=11 // pred_check_branch
          %320 = sbr.rel (%p318) target = $region40
        $region39: #{model_forward.3} parent=11 // pred_region
          _
        $region40: #{model_forward.3} parent=11 // pred_fallthru
          _
        // Predicated region
        $region41: #{model_forward.3} parent=11 // pred_check
          %p321 = pneg %p212
        $region42: #{model_forward.3} parent=11 // pred_check_branch
          %323 = sbr.rel (%p321) target = $region44
        $region43: #{model_forward.3} parent=11 // pred_region
          _
        $region44: #{model_forward.3} parent=11 // pred_fallthru
          _
        // Predicated region
        $region45: #{model_forward.3} parent=11 // pred_check
          %p324 = pneg %p233
        $region46: #{model_forward.3} parent=11 // pred_check_branch
          %326 = sbr.rel (%p324) target = $region48
        $region47: #{model_forward.3} parent=11 // pred_region
          _
        $region48: #{model_forward.3} parent=11 // pred_fallthru
          _
      $region12: #{model_forward.3} parent=5 // pred_fallthru
        _
      %p327 = scmp.lt.s32.totalorder %s18, 2
      // Predicated region
      $region49: #{model_forward.3} parent=5 // pred_check
        %p328 = pneg %p327
      $region50: #{model_forward.3} parent=5 // pred_check_branch
        %330 = sbr.rel (%p328) target = $region52
      $region51: #{model_forward.3} parent=5 // pred_region
        // Predicated region
        $region53: #{model_forward.3} parent=51 // pred_check
          %p331 = pneg %p38
        $region54: #{model_forward.3} parent=51 // pred_check_branch
          %333 = sbr.rel (%p331) target = $region56
        $region55: #{model_forward.3} parent=51 // pred_region
          %s334 = sand.u32 %s28, 1
          %s335 = sand.u32 %s28, 1
          %s336 = smul.addr %s335, 16
          %s337 = scalar_lea.vmem [#allocation2], %s336
          %s338 = smul.addr %s18, 8
          %s339 = scalar_lea.vmem %s0, %s338
          // Predicated region
          $region57: #{model_forward.3} parent=55 // pred_check
            _
          $region58: #{model_forward.3} parent=55 // pred_check_branch
            %341 = sbr.rel (0) target = $region60
          $region59: #{model_forward.3} parent=55 // pred_region
            // Predicated region
            $region61: #{model_forward.3} parent=59 // pred_check
              _
            $region62: #{model_forward.3} parent=59 // pred_check_branch
              %343 = sbr.rel (0) target = $region64
            $region63: #{model_forward.3} parent=59 // pred_region
              // Predicated region
              $region76: #{model_forward.3} parent=63 // pred_check
                _
              $region77: #{model_forward.3} parent=63 // pred_check_branch
                %361 = sbr.rel (0) target = $region79
              $region78: #{model_forward.3} parent=63 // pred_region
                loop: start=0, step=1, limit=1
                $region80: #{model_forward.3} parent=78 // loop_pre_header
                  _
                $region81: #{model_forward.3} parent=78 // loop_header
                  %s363 = sphi 0, %s367
                  %p364 = scmp.ge.s32.totalorder %s363, 1
                  %s368 = sphi %s339, %s339
                  %s369 = sphi %s337, %s337
                $region82: #{model_forward.3} parent=78 // loop_header_branch
                  %366 = sbr.rel (%p364) target = $region86
                $region83: #{model_forward.3} parent=78 // loop_body
                  %v370 = vld [vmem:[%s368] sm:$0xff]
                  %371 = vst [vmem:[%s369] sm:$0xff] %v370
                  %v372 = vld [vmem:[%s368 + $0x10] sm:$0xff]
                  %373 = vst [vmem:[%s369 + $0x8] sm:$0xff] %v372
                $region84: #{model_forward.3} parent=78 // loop_footer
                  %s367 = sadd.s32 1, %s363
                $region85: #{model_forward.3} parent=78 // loop_footer_branch
                  %362 = sbr.rel target = $region81
                $region86: #{model_forward.3} parent=78 // loop_exit
                  _
              $region79: #{model_forward.3} parent=63 // pred_fallthru
                _
              // Predicated region
              $region87: #{model_forward.3} parent=63 // pred_check
                _
              $region88: #{model_forward.3} parent=63 // pred_check_branch
                %375 = sbr.rel target = $region90
              $region89: #{model_forward.3} parent=63 // pred_region
                _
              $region90: #{model_forward.3} parent=63 // pred_fallthru
                _
            $region64: #{model_forward.3} parent=59 // pred_fallthru
              _
            // Predicated region
            $region65: #{model_forward.3} parent=59 // pred_check
              _
            $region66: #{model_forward.3} parent=59 // pred_check_branch
              %345 = sbr.rel target = $region68
            $region67: #{model_forward.3} parent=59 // pred_region
              %s347 = ssub.s32 256, 1
              loop: start=0, step=1, limit=1
              $region69: #{model_forward.3} parent=67 // loop_pre_header
                _
              $region70: #{model_forward.3} parent=67 // loop_header
                %s349 = sphi 0, %s353
                %p350 = scmp.ge.s32.totalorder %s349, 1
                %s354 = sphi %s339, %s339
                %s355 = sphi %s337, %s337
              $region71: #{model_forward.3} parent=67 // loop_header_branch
                %352 = sbr.rel (%p350) target = $region75
              $region72: #{model_forward.3} parent=67 // loop_body
                %v356 = vld [vmem:[%s354] sm:%s347]
                %357 = vst [vmem:[%s355] sm:%s347] %v356
                %v358 = vld [vmem:[%s354 + $0x10] sm:%s347]
                %359 = vst [vmem:[%s355 + $0x8] sm:%s347] %v358
              $region73: #{model_forward.3} parent=67 // loop_footer
                %s353 = sadd.s32 1, %s349
              $region74: #{model_forward.3} parent=67 // loop_footer_branch
                %348 = sbr.rel target = $region70
              $region75: #{model_forward.3} parent=67 // loop_exit
                _
            $region68: #{model_forward.3} parent=59 // pred_fallthru
              _
          $region60: #{model_forward.3} parent=55 // pred_fallthru
            _
          %376 = vnop
        $region56: #{model_forward.3} parent=51 // pred_fallthru
          _
      $region52: #{model_forward.3} parent=5 // pred_fallthru
        _
      %p377 = scmp.le.s32.totalorder 1, %s18
      %p378 = scmp.lt.s32.totalorder %s18, 3
      %p379 = pnand %p377, %p378
      %p380 = pneg %p379
      // Predicated region
      $region91: #{model_forward.3} parent=5 // pred_check
        _
      $region92: #{model_forward.3} parent=5 // pred_check_branch
        %382 = sbr.rel (%p379) target = $region94
      $region93: #{model_forward.3} parent=5 // pred_region
        %s383 = ssub.s32 %s18, 1
        %s384 = sand.u32 %s31, 1
        %s385 = sand.u32 %s31, 1
        %s386 = smul.addr %s385, 16
        %s387 = scalar_lea.vmem [#allocation2], %s386
        // Predicated region
        $region95: #{model_forward.3} parent=93 // pred_check
          %p388 = pneg %p44
        $region96: #{model_forward.3} parent=93 // pred_check_branch
          %390 = sbr.rel (%p388) target = $region98
        $region97: #{model_forward.3} parent=93 // pred_region
          _
        $region98: #{model_forward.3} parent=93 // pred_fallthru
          _
        %s391 = sand.u32 %s31, 1
        %s392 = sand.u32 %s31, 1
        %s393 = smul.addr %s392, 16
        %s394 = scalar_lea.vmem [#allocation2], %s393
        %p395 = pneg %p44
        %p396 = pneg %p41
        %p397 = pneg %p65
        %p398 = pneg %p62
        %p399 = pneg %p86
        %p400 = pneg %p83
        %p401 = pneg %p107
        %p402 = pneg %p104
        %p403 = pneg %p128
        %p404 = pneg %p125
        %p405 = pneg %p149
        %p406 = pneg %p146
        %p407 = pneg %p170
        %p408 = pneg %p167
        %p409 = pneg %p191
        %p410 = pneg %p188
        %p411 = pneg %p212
        %p412 = pneg %p209
        %p413 = pneg %p233
        %p414 = pneg %p230
        %p415 = pneg %p259
        %p416 = pneg %p256
        %p417 = scmp.lt.s32.totalorder %s23, 1
        %s418 = scalar_select %p417, %s23, 1
        %s419 = smul.addr %s418, 8
        %s420 = scalar_lea.vmem %s10, %s419
        %p421 = pneg %p285
        %p422 = pneg %p282
        %p423 = scmp.lt.s32.totalorder %s23, 1
        %s424 = scalar_select %p423, %s23, 1
        %s425 = smul.addr %s424, 8
        %s426 = scalar_lea.vmem %s11, %s425
        %p427 = scmp.lt.s32.totalorder %s23, 1
        %s428 = scalar_select %p427, %s23, 1
        %s429 = smul.addr %s428, 8
        %s430 = scalar_lea.vmem %s10, %s429
        %p431 = scmp.lt.s32.totalorder %s23, 1
        %s432 = scalar_select %p431, %s23, 1
        %s433 = smul.addr %s432, 8
        %s434 = scalar_lea.vmem %s11, %s433
        %v435 = vld [vmem:[%s9] sm:$0xf]
        %v436 = vld [vmem:[%s8] sm:$0xff]
        %v437 = vld [vmem:[%s8 + $0x8] sm:$0xff]
        %v438 = vld [vmem:[%s8 + $0x10] sm:$0xff]
        %v439 = vld [vmem:[%s8 + $0x18] sm:$0xff]
        %v440 = vld [vmem:[%s8 + $0x20] sm:$0xff]
        %v441 = vld [vmem:[%s8 + $0x28] sm:$0xff]
        %v442 = vld [vmem:[%s8 + $0x30] sm:$0xff]
        %v443 = vld [vmem:[%s8 + $0x38] sm:$0xff]
        %v444 = vld [vmem:[%s8 + $0x40] sm:$0xff]
        %v445 = vld [vmem:[%s8 + $0x48] sm:$0xff]
        %v446 = vld [vmem:[%s8 + $0x50] sm:$0xff]
        %v447 = vld [vmem:[%s8 + $0x58] sm:$0xff]
        %v448 = vld [vmem:[%s8 + $0x60] sm:$0xff]
        %v449 = vld [vmem:[%s8 + $0x68] sm:$0xff]
        %v450 = vld [vmem:[%s8 + $0x70] sm:$0xff]
        %v451 = vld [vmem:[%s8 + $0x78] sm:$0xff]
        %v452 = vld [vmem:[%s387] sm:$0xff]
        %v453 = vld [vmem:[%s1] sm:$0xff]
        %v454 = vld [vmem:[%s1 + $0x8] sm:$0xff]
        %v455 = vld [vmem:[%s1 + $0x10] sm:$0xff]
        %v456 = vld [vmem:[%s1 + $0x18] sm:$0xff]
        %v457 = vld [vmem:[%s1 + $0x20] sm:$0xff]
        %v458 = vld [vmem:[%s1 + $0x28] sm:$0xff]
        %v459 = vld [vmem:[%s1 + $0x30] sm:$0xff]
        %v460 = vld [vmem:[%s1 + $0x38] sm:$0xff]
        %vm461 = vcmask 261120
        %v463 = vsel %vm461, %v452, 0
        %465 = vmatprep.subr.mxu0 0.0
        %466 = vmatpush1.msra.mxu0 0.0
        %467 = vmatprep.subr.mxu0 0.0
        %468 = vmatpush1.msra.mxu0 0.0
        %469 = vmatprep.subr.mxu0 0.0
        %470 = vmatpush1.msra.mxu0 0.0
        %471 = vmatprep.subr.mxu0 0.0
        %472 = vmatpush1.msra.mxu0 0.0
        %473 = vmatprep.subr.mxu0 0.0
        %474 = vmatpush1.msra.mxu0 0.0
        %475 = vmatprep.subr.mxu0 0.0
        %476 = vmatpush1.msra.mxu0 0.0
        %477 = vmatprep.subr.mxu0 0.0
        %478 = vmatpush1.msra.mxu0 0.0
        %479 = vmatprep.subr.mxu0 0.0
        %480 = vmatpush1.msra.mxu0 0.0
        %481 = vmatprep.subr.mxu0 0.0
        %482 = vmatpush1.msra.mxu0 0.0
        %483 = vmatprep.subr.mxu0 0.0
        %484 = vmatpush1.msra.mxu0 0.0
        %485 = vmatprep.subr.mxu0 0.0
        %486 = vmatpush1.msra.mxu0 0.0
        %487 = vmatprep.subr.mxu0 0.0
        %488 = vmatpush1.msra.mxu0 0.0
        %489 = vmatprep.subr.mxu0 %v460
        %490 = vmatpush1.msra.mxu0 %v459
        %491 = vmatprep.subr.mxu0 %v458
        %492 = vmatpush1.msra.mxu0 %v457
        %493 = vmatprep.subr.mxu0 %v456
        %494 = vmatpush1.msra.mxu0 %v455
        %495 = vmatprep.subr.mxu0 %v454
        %496 = vmatpush1.msra.mxu0 %v453
        %497 = vmatprep.subr.mxu0 0.0
        %498 = vmatpush2.msra.mxu0 0.0
        %499 = vmatprep.subr.mxu0 0.0
        %500 = vmatpush2.msra.mxu0 0.0
        %501 = vmatprep.subr.mxu0 0.0
        %502 = vmatpush2.msra.mxu0 0.0
        %503 = vmatprep.subr.mxu0 0.0
        %504 = vmatpush2.msra.mxu0 0.0
        %505 = vmatprep.subr.mxu0 0.0
        %506 = vmatpush2.msra.mxu0 0.0
        %507 = vmatprep.subr.mxu0 0.0
        %508 = vmatpush2.msra.mxu0 0.0
        %509 = vmatprep.subr.mxu0 0.0
        %510 = vmatpush2.msra.mxu0 0.0
        %511 = vmatprep.subr.mxu0 0.0
        %512 = vmatpush2.msra.mxu0 0.0
        %513 = vmatprep.subr.mxu0 0.0
        %514 = vmatpush2.msra.mxu0 0.0
        %515 = vmatprep.subr.mxu0 0.0
        %516 = vmatpush2.msra.mxu0 0.0
        %517 = vmatprep.subr.mxu0 0.0
        %518 = vmatpush2.msra.mxu0 0.0
        %519 = vmatprep.subr.mxu0 0.0
        %520 = vmatpush2.msra.mxu0 0.0
        %521 = vmatprep.subr.mxu0 0.0
        %522 = vmatpush2.msra.mxu0 0.0
        %523 = vmatprep.subr.mxu0 0.0
        %524 = vmatpush2.msra.mxu0 0.0
        %525 = vmatprep.subr.mxu0 0.0
        %526 = vmatpush2.msra.mxu0 0.0
        %527 = vmatprep.subr.mxu0 0.0
        %528 = vmatpush2.msra.mxu0 0.0
        %529 = vmatprep.mubr.f32.mxu0 0.0
        %530 = vmatmul.mubr.f32.gmra.mxu0 %v463
        %v531 = vpop.f32.mrf.mxu0
        %v532 = vadd.f32 0.0, %v531
        %v533 = vpop.f32.mrf.mxu0
        %v534 = vadd.f32 0.0, %v533
        %535 = vdwg.mxu0
        %v536 = vld [vmem:[%s2] sm:$0x1]
        %v538 = vlaneseq
        %v539 = vshrl.u32 %v538, 7
        %v540 = vsub.s32 0, %v539
        %v541 = vrot.slane %v536, %v540
        %v543 = vadd.f32 %v532, %v541
        %v544 = vmax.f32 %v543, 0.0
        %v545 = vmul.f32 %v452, %v452
        %v546 = vsel %vm461, %v545, 0.0
        %547 = vadd.xlane.f32.xlu0 %v546
        %v548 = vpop.xlane.xlu0 %547
        %v549 = vmax.f32 %v548, 1e-16
        %v550 = vrsqrt.pop %v549
        %v551 = vmul.f32 %v534, %v550
        %v552 = vsub.f32 1.0, %v551
        %v553 = vmul.f32 %v552, -0.5
        %vm554 = vcmask 31744
        %v555 = vsel %vm554, %v553, -inf
        %556 = vmax.xlane.f32.xlu0 %v555
        %v557 = vpop.xlane.xlu0 %556
        %v558 = vsub.f32 %v553, %v557
        %v559 = vmul.f32 %v558, 1.442695
        %v560 = vpow.pop %v559
        %v561 = vsel %vm554, %v560, 0.0
        %562 = vadd.xlane.f32.xlu0 %v561
        %v563 = vpop.xlane.xlu0 %562
        %v564 = vrcp.pop %v563
        %v565 = vmul.f32 %v560, %v564
        %v566 = vsel %vm554, %v565, -inf
        %567 = vmax.xlane.f32.xlu0 %v566
        %v568 = vpop.xlane.xlu0 %567
        %v569 = vsub.f32 %v565, %v568
        %v570 = vmul.f32 %v569, 1.442695
        %v571 = vpow.pop %v570
        %v572 = vsel %vm554, %v571, 0.0
        %573 = vadd.xlane.f32.xlu0 %v572
        %v574 = vpop.xlane.xlu0 %573
        %v575 = vrcp.pop %v574
        %v576 = vmul.f32 %v571, %v575
        %s577 = scalar_lea.vmem %s387, 8 [#allocation2]
        %v578 = vld [vmem:[%s577] sm:$0xff]
        %v579 = vld [vmem:[%s5] sm:$0xff]
        %v580 = vld [vmem:[%s5 + $0x8] sm:$0xff]
        %v581 = vld [vmem:[%s5 + $0x10] sm:$0xff]
        %v582 = vld [vmem:[%s5 + $0x18] sm:$0xff]
        %v583 = vld [vmem:[%s6] sm:$0xff]
        %v584 = vld [vmem:[%s6 + $0x8] sm:$0xff]
        %v585 = vld [vmem:[%s6 + $0x10] sm:$0xff]
        %v586 = vld [vmem:[%s6 + $0x18] sm:$0xff]
        %v587 = vld [vmem:[%s6 + $0x20] sm:$0xff]
        %v588 = vld [vmem:[%s6 + $0x28] sm:$0xff]
        %v589 = vld [vmem:[%s6 + $0x30] sm:$0xff]
        %v590 = vld [vmem:[%s6 + $0x38] sm:$0xff]
        %v591 = vld [vmem:[%s6 + $0x40] sm:$0xff]
        %v592 = vld [vmem:[%s6 + $0x48] sm:$0xff]
        %v593 = vld [vmem:[%s6 + $0x50] sm:$0xff]
        %v594 = vld [vmem:[%s6 + $0x58] sm:$0xff]
        %v595 = vld [vmem:[%s6 + $0x60] sm:$0xff]
        %v596 = vld [vmem:[%s6 + $0x68] sm:$0xff]
        %v597 = vld [vmem:[%s6 + $0x70] sm:$0xff]
        %v598 = vld [vmem:[%s6 + $0x78] sm:$0xff]
        %599 = vmatprep.subr.mxu0 0.0
        %600 = vmatpush1.msra.mxu0 %v598
        %601 = vmatprep.subr.mxu0 0.0
        %602 = vmatpush1.msra.mxu0 %v597
        %603 = vmatprep.subr.mxu0 0.0
        %604 = vmatpush1.msra.mxu0 %v596
        %605 = vmatprep.subr.mxu0 0.0
        %606 = vmatpush1.msra.mxu0 %v595
        %607 = vmatprep.subr.mxu0 0.0
        %608 = vmatpush1.msra.mxu0 %v594
        %609 = vmatprep.subr.mxu0 0.0
        %610 = vmatpush1.msra.mxu0 %v593
        %611 = vmatprep.subr.mxu0 0.0
        %612 = vmatpush1.msra.mxu0 %v592
        %613 = vmatprep.subr.mxu0 0.0
        %614 = vmatpush1.msra.mxu0 %v591
        %615 = vmatprep.subr.mxu0 0.0
        %616 = vmatpush1.msra.mxu0 %v590
        %617 = vmatprep.subr.mxu0 0.0
        %618 = vmatpush1.msra.mxu0 %v589
        %619 = vmatprep.subr.mxu0 0.0
        %620 = vmatpush1.msra.mxu0 %v588
        %621 = vmatprep.subr.mxu0 0.0
        %622 = vmatpush1.msra.mxu0 %v587
        %623 = vmatprep.subr.mxu0 0.0
        %624 = vmatpush1.msra.mxu0 %v586
        %625 = vmatprep.subr.mxu0 0.0
        %626 = vmatpush1.msra.mxu0 %v585
        %627 = vmatprep.subr.mxu0 0.0
        %628 = vmatpush1.msra.mxu0 %v584
        %629 = vmatprep.subr.mxu0 0.0
        %630 = vmatpush1.msra.mxu0 %v583
        %631 = vmatprep.subr.mxu0 0.0
        %632 = vmatpush2.msra.mxu0 0.0
        %633 = vmatprep.subr.mxu0 0.0
        %634 = vmatpush2.msra.mxu0 0.0
        %635 = vmatprep.subr.mxu0 0.0
        %636 = vmatpush2.msra.mxu0 0.0
        %637 = vmatprep.subr.mxu0 0.0
        %638 = vmatpush2.msra.mxu0 0.0
        %639 = vmatprep.subr.mxu0 0.0
        %640 = vmatpush2.msra.mxu0 0.0
        %641 = vmatprep.subr.mxu0 0.0
        %642 = vmatpush2.msra.mxu0 0.0
        %643 = vmatprep.subr.mxu0 0.0
        %644 = vmatpush2.msra.mxu0 0.0
        %645 = vmatprep.subr.mxu0 0.0
        %646 = vmatpush2.msra.mxu0 0.0
        %647 = vmatprep.subr.mxu0 0.0
        %648 = vmatpush2.msra.mxu0 0.0
        %649 = vmatprep.subr.mxu0 0.0
        %650 = vmatpush2.msra.mxu0 0.0
        %651 = vmatprep.subr.mxu0 0.0
        %652 = vmatpush2.msra.mxu0 0.0
        %653 = vmatprep.subr.mxu0 0.0
        %654 = vmatpush2.msra.mxu0 0.0
        %655 = vmatprep.subr.mxu0 0.0
        %656 = vmatpush2.msra.mxu0 0.0
        %657 = vmatprep.subr.mxu0 0.0
        %658 = vmatpush2.msra.mxu0 0.0
        %659 = vmatprep.subr.mxu0 0.0
        %660 = vmatpush2.msra.mxu0 0.0
        %661 = vmatprep.subr.mxu0 0.0
        %662 = vmatpush2.msra.mxu0 0.0
        %663 = vmatprep.mubr.f32.mxu0 0.0
        %664 = vmatmul.mubr.f32.gmra.mxu0 %v544
        %v665 = vpop.f32.mrf.mxu0
        %v666 = vadd.f32 0.0, %v665
        %v667 = vpop.f32.mrf.mxu0
        %668 = vdwg.mxu0
        %v670 = vsel %vm461, %v578, 0
        %672 = vmatprep.subr.mxu0 0.0
        %673 = vmatpush1.msra.mxu0 0.0
        %674 = vmatprep.subr.mxu0 0.0
        %675 = vmatpush1.msra.mxu0 0.0
        %676 = vmatprep.subr.mxu0 0.0
        %677 = vmatpush1.msra.mxu0 0.0
        %678 = vmatprep.subr.mxu0 0.0
        %679 = vmatpush1.msra.mxu0 0.0
        %680 = vmatprep.subr.mxu0 0.0
        %681 = vmatpush1.msra.mxu0 0.0
        %682 = vmatprep.subr.mxu0 0.0
        %683 = vmatpush1.msra.mxu0 0.0
        %684 = vmatprep.subr.mxu0 0.0
        %685 = vmatpush1.msra.mxu0 0.0
        %686 = vmatprep.subr.mxu0 0.0
        %687 = vmatpush1.msra.mxu0 0.0
        %688 = vmatprep.subr.mxu0 0.0
        %689 = vmatpush1.msra.mxu0 0.0
        %690 = vmatprep.subr.mxu0 0.0
        %691 = vmatpush1.msra.mxu0 0.0
        %692 = vmatprep.subr.mxu0 0.0
        %693 = vmatpush1.msra.mxu0 0.0
        %694 = vmatprep.subr.mxu0 0.0
        %695 = vmatpush1.msra.mxu0 0.0
        %696 = vmatprep.subr.mxu0 0.0
        %697 = vmatpush1.msra.mxu0 %v582
        %698 = vmatprep.subr.mxu0 0.0
        %699 = vmatpush1.msra.mxu0 %v581
        %700 = vmatprep.subr.mxu0 0.0
        %701 = vmatpush1.msra.mxu0 %v580
        %702 = vmatprep.subr.mxu0 0.0
        %703 = vmatpush1.msra.mxu0 %v579
        %704 = vmatprep.subr.mxu0 0.0
        %705 = vmatpush2.msra.mxu0 0.0
        %706 = vmatprep.subr.mxu0 0.0
        %707 = vmatpush2.msra.mxu0 0.0
        %708 = vmatprep.subr.mxu0 0.0
        %709 = vmatpush2.msra.mxu0 0.0
        %710 = vmatprep.subr.mxu0 0.0
        %711 = vmatpush2.msra.mxu0 0.0
        %712 = vmatprep.subr.mxu0 0.0
        %713 = vmatpush2.msra.mxu0 0.0
        %714 = vmatprep.subr.mxu0 0.0
        %715 = vmatpush2.msra.mxu0 0.0
        %716 = vmatprep.subr.mxu0 0.0
        %717 = vmatpush2.msra.mxu0 0.0
        %718 = vmatprep.subr.mxu0 0.0
        %719 = vmatpush2.msra.mxu0 0.0
        %720 = vmatprep.subr.mxu0 0.0
        %721 = vmatpush2.msra.mxu0 0.0
        %722 = vmatprep.subr.mxu0 0.0
        %723 = vmatpush2.msra.mxu0 0.0
        %724 = vmatprep.subr.mxu0 0.0
        %725 = vmatpush2.msra.mxu0 0.0
        %726 = vmatprep.subr.mxu0 0.0
        %727 = vmatpush2.msra.mxu0 0.0
        %728 = vmatprep.subr.mxu0 0.0
        %729 = vmatpush2.msra.mxu0 0.0
        %730 = vmatprep.subr.mxu0 0.0
        %731 = vmatpush2.msra.mxu0 0.0
        %732 = vmatprep.subr.mxu0 0.0
        %733 = vmatpush2.msra.mxu0 0.0
        %734 = vmatprep.subr.mxu0 0.0
        %735 = vmatpush2.msra.mxu0 0.0
        %736 = vmatprep.mubr.f32.mxu0 0.0
        %737 = vmatmul.mubr.f32.gmra.mxu0 %v670
        %v738 = vpop.f32.mrf.mxu0
        %v739 = vadd.f32 %v666, %v738
        %v740 = vpop.f32.mrf.mxu0
        %741 = vdwg.mxu0
        %v742 = vld [vmem:[%s7] sm:$0x1]
        %v744 = vlaneseq
        %v745 = vshrl.u32 %v744, 7
        %v746 = vsub.s32 0, %v745
        %v747 = vrot.slane %v742, %v746
        %v749 = vadd.f32 %v739, %v747
        %v750 = vld [vmem:[%s3] sm:$0xff]
        %v751 = vld [vmem:[%s3 + $0x8] sm:$0xff]
        %v752 = vld [vmem:[%s3 + $0x10] sm:$0xff]
        %v753 = vld [vmem:[%s3 + $0x18] sm:$0xff]
        %v754 = vld [vmem:[%s3 + $0x20] sm:$0xff]
        %v755 = vld [vmem:[%s3 + $0x28] sm:$0xff]
        %v756 = vld [vmem:[%s3 + $0x30] sm:$0xff]
        %v757 = vld [vmem:[%s3 + $0x38] sm:$0xff]
        %v758 = vld [vmem:[%s3 + $0x40] sm:$0xff]
        %v759 = vld [vmem:[%s3 + $0x48] sm:$0xff]
        %v760 = vld [vmem:[%s3 + $0x50] sm:$0xff]
        %v761 = vld [vmem:[%s3 + $0x58] sm:$0xff]
        %v762 = vld [vmem:[%s3 + $0x60] sm:$0xff]
        %v763 = vld [vmem:[%s3 + $0x68] sm:$0xff]
        %v764 = vld [vmem:[%s3 + $0x70] sm:$0xff]
        %v765 = vld [vmem:[%s3 + $0x78] sm:$0xff]
        %v766 = vld [vmem:[%s3 + $0x80] sm:$0xff]
        %v767 = vld [vmem:[%s3 + $0x88] sm:$0xff]
        %v768 = vld [vmem:[%s3 + $0x90] sm:$0xff]
        %v769 = vld [vmem:[%s3 + $0x98] sm:$0xff]
        %v770 = vld [vmem:[%s3 + $0xa0] sm:$0xff]
        %v771 = vld [vmem:[%s3 + $0xa8] sm:$0xff]
        %v772 = vld [vmem:[%s3 + $0xb0] sm:$0xff]
        %v773 = vld [vmem:[%s3 + $0xb8] sm:$0xff]
        %v774 = vld [vmem:[%s3 + $0xc0] sm:$0xff]
        %v775 = vld [vmem:[%s3 + $0xc8] sm:$0xff]
        %v776 = vld [vmem:[%s3 + $0xd0] sm:$0xff]
        %v777 = vld [vmem:[%s3 + $0xd8] sm:$0xff]
        %v778 = vld [vmem:[%s3 + $0xe0] sm:$0xff]
        %v779 = vld [vmem:[%s3 + $0xe8] sm:$0xff]
        %v780 = vld [vmem:[%s3 + $0xf0] sm:$0xff]
        %v781 = vld [vmem:[%s3 + $0xf8] sm:$0xff]
        %v782 = vld [vmem:[%s3 + $0x100] sm:$0xff]
        %v783 = vld [vmem:[%s3 + $0x108] sm:$0xff]
        %v784 = vld [vmem:[%s3 + $0x110] sm:$0xff]
        %v785 = vld [vmem:[%s3 + $0x118] sm:$0xff]
        %v786 = vld [vmem:[%s3 + $0x120] sm:$0xff]
        %v787 = vld [vmem:[%s3 + $0x128] sm:$0xff]
        %v788 = vld [vmem:[%s3 + $0x130] sm:$0xff]
        %v789 = vld [vmem:[%s3 + $0x138] sm:$0xff]
        %v790 = vld [vmem:[%s3 + $0x140] sm:$0xff]
        %v791 = vld [vmem:[%s3 + $0x148] sm:$0xff]
        %v792 = vld [vmem:[%s3 + $0x150] sm:$0xff]
        %v793 = vld [vmem:[%s3 + $0x158] sm:$0xff]
        %v794 = vld [vmem:[%s3 + $0x160] sm:$0xff]
        %v795 = vld [vmem:[%s3 + $0x168] sm:$0xff]
        %v796 = vld [vmem:[%s3 + $0x170] sm:$0xff]
        %v797 = vld [vmem:[%s3 + $0x178] sm:$0xff]
        %v798 = vld [vmem:[%s3 + $0x180] sm:$0xff]
        %v799 = vld [vmem:[%s3 + $0x188] sm:$0xff]
        %v800 = vld [vmem:[%s3 + $0x190] sm:$0xff]
        %v801 = vld [vmem:[%s3 + $0x198] sm:$0xff]
        %v802 = vld [vmem:[%s3 + $0x1a0] sm:$0xff]
        %v803 = vld [vmem:[%s3 + $0x1a8] sm:$0xff]
        %v804 = vld [vmem:[%s3 + $0x1b0] sm:$0xff]
        %v805 = vld [vmem:[%s3 + $0x1b8] sm:$0xff]
        %v806 = vld [vmem:[%s3 + $0x1c0] sm:$0xff]
        %v807 = vld [vmem:[%s3 + $0x1c8] sm:$0xff]
        %v808 = vld [vmem:[%s3 + $0x1d0] sm:$0xff]
        %v809 = vld [vmem:[%s3 + $0x1d8] sm:$0xff]
        %v810 = vld [vmem:[%s3 + $0x1e0] sm:$0xff]
        %v811 = vld [vmem:[%s3 + $0x1e8] sm:$0xff]
        %v812 = vld [vmem:[%s3 + $0x1f0] sm:$0xff]
        %v813 = vld [vmem:[%s3 + $0x1f8] sm:$0xff]
        %v814 = vld [vmem:[%s3 + $0x200] sm:$0xff]
        %v815 = vld [vmem:[%s3 + $0x208] sm:$0xff]
        %v816 = vld [vmem:[%s3 + $0x210] sm:$0xff]
        %v817 = vld [vmem:[%s3 + $0x218] sm:$0xff]
        %v818 = vld [vmem:[%s3 + $0x220] sm:$0xff]
        %v819 = vld [vmem:[%s3 + $0x228] sm:$0xff]
        %v820 = vld [vmem:[%s3 + $0x230] sm:$0xff]
        %v821 = vld [vmem:[%s3 + $0x238] sm:$0xff]
        %v822 = vld [vmem:[%s3 + $0x240] sm:$0xff]
        %v823 = vld [vmem:[%s3 + $0x248] sm:$0xff]
        %v824 = vld [vmem:[%s3 + $0x250] sm:$0xff]
        %v825 = vld [vmem:[%s3 + $0x258] sm:$0xff]
        %v826 = vld [vmem:[%s3 + $0x260] sm:$0xff]
        %v827 = vld [vmem:[%s3 + $0x268] sm:$0xff]
        %v828 = vld [vmem:[%s3 + $0x270] sm:$0xff]
        %v829 = vld [vmem:[%s3 + $0x278] sm:$0xff]
        %830 = vmatprep.subr.mxu0 %v826
        %831 = vmatpush1.msra.mxu0 %v825
        %832 = vmatprep.subr.mxu0 %v821
        %833 = vmatpush1.msra.mxu0 %v820
        %834 = vmatprep.subr.mxu0 %v816
        %835 = vmatpush1.msra.mxu0 %v815
        %836 = vmatprep.subr.mxu0 %v811
        %837 = vmatpush1.msra.mxu0 %v810
        %838 = vmatprep.subr.mxu0 %v806
        %839 = vmatpush1.msra.mxu0 %v805
        %840 = vmatprep.subr.mxu0 %v801
        %841 = vmatpush1.msra.mxu0 %v800
        %842 = vmatprep.subr.mxu0 %v796
        %843 = vmatpush1.msra.mxu0 %v795
        %844 = vmatprep.subr.mxu0 %v791
        %845 = vmatpush1.msra.mxu0 %v790
        %846 = vmatprep.subr.mxu0 %v786
        %847 = vmatpush1.msra.mxu0 %v785
        %848 = vmatprep.subr.mxu0 %v781
        %849 = vmatpush1.msra.mxu0 %v780
        %850 = vmatprep.subr.mxu0 %v776
        %851 = vmatpush1.msra.mxu0 %v775
        %852 = vmatprep.subr.mxu0 %v771
        %853 = vmatpush1.msra.mxu0 %v770
        %854 = vmatprep.subr.mxu0 %v766
        %855 = vmatpush1.msra.mxu0 %v765
        %856 = vmatprep.subr.mxu0 %v761
        %857 = vmatpush1.msra.mxu0 %v760
        %858 = vmatprep.subr.mxu0 %v756
        %859 = vmatpush1.msra.mxu0 %v755
        %860 = vmatprep.subr.mxu0 %v751
        %861 = vmatpush1.msra.mxu0 %v750
        %862 = vmatprep.subr.mxu0 0.0
        %863 = vmatpush2.msra.mxu0 0.0
        %864 = vmatprep.subr.mxu0 0.0
        %865 = vmatpush2.msra.mxu0 0.0
        %866 = vmatprep.subr.mxu0 0.0
        %867 = vmatpush2.msra.mxu0 0.0
        %868 = vmatprep.subr.mxu0 0.0
        %869 = vmatpush2.msra.mxu0 0.0
        %870 = vmatprep.subr.mxu0 0.0
        %871 = vmatpush2.msra.mxu0 0.0
        %872 = vmatprep.subr.mxu0 0.0
        %873 = vmatpush2.msra.mxu0 0.0
        %874 = vmatprep.subr.mxu0 0.0
        %875 = vmatpush2.msra.mxu0 0.0
        %876 = vmatprep.subr.mxu0 0.0
        %877 = vmatpush2.msra.mxu0 0.0
        %878 = vmatprep.subr.mxu0 0.0
        %879 = vmatpush2.msra.mxu0 0.0
        %880 = vmatprep.subr.mxu0 0.0
        %881 = vmatpush2.msra.mxu0 0.0
        %882 = vmatprep.subr.mxu0 0.0
        %883 = vmatpush2.msra.mxu0 0.0
        %884 = vmatprep.subr.mxu0 0.0
        %885 = vmatpush2.msra.mxu0 0.0
        %886 = vmatprep.subr.mxu0 0.0
        %887 = vmatpush2.msra.mxu0 0.0
        %888 = vmatprep.subr.mxu0 0.0
        %889 = vmatpush2.msra.mxu0 0.0
        %890 = vmatprep.subr.mxu0 0.0
        %891 = vmatpush2.msra.mxu0 0.0
        %892 = vmatprep.subr.mxu0 0.0
        %893 = vmatpush2.msra.mxu0 0.0
        %894 = vmatprep.mubr.f32.mxu0 0.0
        %895 = vmatmul.mubr.f32.gmra.mxu0 %v749
        %v896 = vpop.f32.mrf.mxu0
        %v897 = vadd.f32 0.0, %v896
        %v898 = vpop.f32.mrf.mxu0
        %v899 = vadd.f32 0.0, %v898
        %900 = vdwg.mxu0
        %901 = vmatprep.subr.mxu0 %v828
        %902 = vmatpush1.msra.mxu0 %v827
        %903 = vmatprep.subr.mxu0 %v823
        %904 = vmatpush1.msra.mxu0 %v822
        %905 = vmatprep.subr.mxu0 %v818
        %906 = vmatpush1.msra.mxu0 %v817
        %907 = vmatprep.subr.mxu0 %v813
        %908 = vmatpush1.msra.mxu0 %v812
        %909 = vmatprep.subr.mxu0 %v808
        %910 = vmatpush1.msra.mxu0 %v807
        %911 = vmatprep.subr.mxu0 %v803
        %912 = vmatpush1.msra.mxu0 %v802
        %913 = vmatprep.subr.mxu0 %v798
        %914 = vmatpush1.msra.mxu0 %v797
        %915 = vmatprep.subr.mxu0 %v793
        %916 = vmatpush1.msra.mxu0 %v792
        %917 = vmatprep.subr.mxu0 %v788
        %918 = vmatpush1.msra.mxu0 %v787
        %919 = vmatprep.subr.mxu0 %v783
        %920 = vmatpush1.msra.mxu0 %v782
        %921 = vmatprep.subr.mxu0 %v778
        %922 = vmatpush1.msra.mxu0 %v777
        %923 = vmatprep.subr.mxu0 %v773
        %924 = vmatpush1.msra.mxu0 %v772
        %925 = vmatprep.subr.mxu0 %v768
        %926 = vmatpush1.msra.mxu0 %v767
        %927 = vmatprep.subr.mxu0 %v763
        %928 = vmatpush1.msra.mxu0 %v762
        %929 = vmatprep.subr.mxu0 %v758
        %930 = vmatpush1.msra.mxu0 %v757
        %931 = vmatprep.subr.mxu0 %v753
        %932 = vmatpush1.msra.mxu0 %v752
        %933 = vmatprep.subr.mxu0 0.0
        %934 = vmatpush2.msra.mxu0 0.0
        %935 = vmatprep.subr.mxu0 0.0
        %936 = vmatpush2.msra.mxu0 0.0
        %937 = vmatprep.subr.mxu0 0.0
        %938 = vmatpush2.msra.mxu0 0.0
        %939 = vmatprep.subr.mxu0 0.0
        %940 = vmatpush2.msra.mxu0 0.0
        %941 = vmatprep.subr.mxu0 0.0
        %942 = vmatpush2.msra.mxu0 0.0
        %943 = vmatprep.subr.mxu0 0.0
        %944 = vmatpush2.msra.mxu0 0.0
        %945 = vmatprep.subr.mxu0 0.0
        %946 = vmatpush2.msra.mxu0 0.0
        %947 = vmatprep.subr.mxu0 0.0
        %948 = vmatpush2.msra.mxu0 0.0
        %949 = vmatprep.subr.mxu0 0.0
        %950 = vmatpush2.msra.mxu0 0.0
        %951 = vmatprep.subr.mxu0 0.0
        %952 = vmatpush2.msra.mxu0 0.0
        %953 = vmatprep.subr.mxu0 0.0
        %954 = vmatpush2.msra.mxu0 0.0
        %955 = vmatprep.subr.mxu0 0.0
        %956 = vmatpush2.msra.mxu0 0.0
        %957 = vmatprep.subr.mxu0 0.0
        %958 = vmatpush2.msra.mxu0 0.0
        %959 = vmatprep.subr.mxu0 0.0
        %960 = vmatpush2.msra.mxu0 0.0
        %961 = vmatprep.subr.mxu0 0.0
        %962 = vmatpush2.msra.mxu0 0.0
        %963 = vmatprep.subr.mxu0 0.0
        %964 = vmatpush2.msra.mxu0 0.0
        %965 = vmatprep.mubr.f32.mxu0 0.0
        %966 = vmatmul.mubr.f32.gmra.mxu0 %v749
        %v967 = vpop.f32.mrf.mxu0
        %v968 = vadd.f32 0.0, %v967
        %v969 = vpop.f32.mrf.mxu0
        %v970 = vadd.f32 0.0, %v969
        %971 = vdwg.mxu0
        %972 = vmatprep.subr.mxu0 0.0
        %973 = vmatpush1.msra.mxu0 %v829
        %974 = vmatprep.subr.mxu0 0.0
        %975 = vmatpush1.msra.mxu0 %v824
        %976 = vmatprep.subr.mxu0 0.0
        %977 = vmatpush1.msra.mxu0 %v819
        %978 = vmatprep.subr.mxu0 0.0
        %979 = vmatpush1.msra.mxu0 %v814
        %980 = vmatprep.subr.mxu0 0.0
        %981 = vmatpush1.msra.mxu0 %v809
        %982 = vmatprep.subr.mxu0 0.0
        %983 = vmatpush1.msra.mxu0 %v804
        %984 = vmatprep.subr.mxu0 0.0
        %985 = vmatpush1.msra.mxu0 %v799
        %986 = vmatprep.subr.mxu0 0.0
        %987 = vmatpush1.msra.mxu0 %v794
        %988 = vmatprep.subr.mxu0 0.0
        %989 = vmatpush1.msra.mxu0 %v789
        %990 = vmatprep.subr.mxu0 0.0
        %991 = vmatpush1.msra.mxu0 %v784
        %992 = vmatprep.subr.mxu0 0.0
        %993 = vmatpush1.msra.mxu0 %v779
        %994 = vmatprep.subr.mxu0 0.0
        %995 = vmatpush1.msra.mxu0 %v774
        %996 = vmatprep.subr.mxu0 0.0
        %997 = vmatpush1.msra.mxu0 %v769
        %998 = vmatprep.subr.mxu0 0.0
        %999 = vmatpush1.msra.mxu0 %v764
        %1000 = vmatprep.subr.mxu0 0.0
        %1001 = vmatpush1.msra.mxu0 %v759
        %1002 = vmatprep.subr.mxu0 0.0
        %1003 = vmatpush1.msra.mxu0 %v754
        %1004 = vmatprep.subr.mxu0 0.0
        %1005 = vmatpush2.msra.mxu0 0.0
        %1006 = vmatprep.subr.mxu0 0.0
        %1007 = vmatpush2.msra.mxu0 0.0
        %1008 = vmatprep.subr.mxu0 0.0
        %1009 = vmatpush2.msra.mxu0 0.0
        %1010 = vmatprep.subr.mxu0 0.0
        %1011 = vmatpush2.msra.mxu0 0.0
        %1012 = vmatprep.subr.mxu0 0.0
        %1013 = vmatpush2.msra.mxu0 0.0
        %1014 = vmatprep.subr.mxu0 0.0
        %1015 = vmatpush2.msra.mxu0 0.0
        %1016 = vmatprep.subr.mxu0 0.0
        %1017 = vmatpush2.msra.mxu0 0.0
        %1018 = vmatprep.subr.mxu0 0.0
        %1019 = vmatpush2.msra.mxu0 0.0
        %1020 = vmatprep.subr.mxu0 0.0
        %1021 = vmatpush2.msra.mxu0 0.0
        %1022 = vmatprep.subr.mxu0 0.0
        %1023 = vmatpush2.msra.mxu0 0.0
        %1024 = vmatprep.subr.mxu0 0.0
        %1025 = vmatpush2.msra.mxu0 0.0
        %1026 = vmatprep.subr.mxu0 0.0
        %1027 = vmatpush2.msra.mxu0 0.0
        %1028 = vmatprep.subr.mxu0 0.0
        %1029 = vmatpush2.msra.mxu0 0.0
        %1030 = vmatprep.subr.mxu0 0.0
        %1031 = vmatpush2.msra.mxu0 0.0
        %1032 = vmatprep.subr.mxu0 0.0
        %1033 = vmatpush2.msra.mxu0 0.0
        %1034 = vmatprep.subr.mxu0 0.0
        %1035 = vmatpush2.msra.mxu0 0.0
        %1036 = vmatprep.mubr.f32.mxu0 0.0
        %1037 = vmatmul.mubr.f32.gmra.mxu0 %v749
        %v1038 = vpop.f32.mrf.mxu0
        %v1039 = vadd.f32 0.0, %v1038
        %v1040 = vpop.f32.mrf.mxu0
        %1041 = vdwg.mxu0
        %v1042 = vmul.f32 %v749, %v749
        %1043 = vmatprep.subr.mxu0 0.0
        %1044 = vmatpush1.msra.mxu0 %v451
        %1045 = vmatprep.subr.mxu0 0.0
        %1046 = vmatpush1.msra.mxu0 %v450
        %1047 = vmatprep.subr.mxu0 0.0
        %1048 = vmatpush1.msra.mxu0 %v449
        %1049 = vmatprep.subr.mxu0 0.0
        %1050 = vmatpush1.msra.mxu0 %v448
        %1051 = vmatprep.subr.mxu0 0.0
        %1052 = vmatpush1.msra.mxu0 %v447
        %1053 = vmatprep.subr.mxu0 0.0
        %1054 = vmatpush1.msra.mxu0 %v446
        %1055 = vmatprep.subr.mxu0 0.0
        %1056 = vmatpush1.msra.mxu0 %v445
        %1057 = vmatprep.subr.mxu0 0.0
        %1058 = vmatpush1.msra.mxu0 %v444
        %1059 = vmatprep.subr.mxu0 0.0
        %1060 = vmatpush1.msra.mxu0 %v443
        %1061 = vmatprep.subr.mxu0 0.0
        %1062 = vmatpush1.msra.mxu0 %v442
        %1063 = vmatprep.subr.mxu0 0.0
        %1064 = vmatpush1.msra.mxu0 %v441
        %1065 = vmatprep.subr.mxu0 0.0
        %1066 = vmatpush1.msra.mxu0 %v440
        %1067 = vmatprep.subr.mxu0 0.0
        %1068 = vmatpush1.msra.mxu0 %v439
        %1069 = vmatprep.subr.mxu0 0.0
        %1070 = vmatpush1.msra.mxu0 %v438
        %1071 = vmatprep.subr.mxu0 0.0
        %1072 = vmatpush1.msra.mxu0 %v437
        %1073 = vmatprep.subr.mxu0 0.0
        %1074 = vmatpush1.msra.mxu0 %v436
        %1075 = vmatprep.subr.mxu0 0.0
        %1076 = vmatpush2.msra.mxu0 0.0
        %1077 = vmatprep.subr.mxu0 0.0
        %1078 = vmatpush2.msra.mxu0 0.0
        %1079 = vmatprep.subr.mxu0 0.0
        %1080 = vmatpush2.msra.mxu0 0.0
        %1081 = vmatprep.subr.mxu0 0.0
        %1082 = vmatpush2.msra.mxu0 0.0
        %1083 = vmatprep.subr.mxu0 0.0
        %1084 = vmatpush2.msra.mxu0 0.0
        %1085 = vmatprep.subr.mxu0 0.0
        %1086 = vmatpush2.msra.mxu0 0.0
        %1087 = vmatprep.subr.mxu0 0.0
        %1088 = vmatpush2.msra.mxu0 0.0
        %1089 = vmatprep.subr.mxu0 0.0
        %1090 = vmatpush2.msra.mxu0 0.0
        %1091 = vmatprep.subr.mxu0 0.0
        %1092 = vmatpush2.msra.mxu0 0.0
        %1093 = vmatprep.subr.mxu0 0.0
        %1094 = vmatpush2.msra.mxu0 0.0
        %1095 = vmatprep.subr.mxu0 0.0
        %1096 = vmatpush2.msra.mxu0 0.0
        %1097 = vmatprep.subr.mxu0 0.0
        %1098 = vmatpush2.msra.mxu0 0.0
        %1099 = vmatprep.subr.mxu0 0.0
        %1100 = vmatpush2.msra.mxu0 0.0
        %1101 = vmatprep.subr.mxu0 0.0
        %1102 = vmatpush2.msra.mxu0 0.0
        %1103 = vmatprep.subr.mxu0 0.0
        %1104 = vmatpush2.msra.mxu0 0.0
        %1105 = vmatprep.subr.mxu0 0.0
        %1106 = vmatpush2.msra.mxu0 0.0
        %1107 = vmatprep.mubr.f32.mxu0 0.0
        %1108 = vmatmul.mubr.f32.gmra.mxu0 %v1042
        %v1109 = vpop.f32.mrf.mxu0
        %v1110 = vadd.f32 0.0, %v1109
        %v1111 = vpop.f32.mrf.mxu0
        %1112 = vdwg.mxu0
        %v1113 = vmax.f32 %v1110, 1e-16
        %v1114 = vrsqrt.pop %v1113
        %1116 = vset.pattern.permute.xlu0 0
        %1117 = vperm.xlu0 %1116, %v1114
        %v1118 = vpop.permute.xlu0 %1117
        %v1120 = vmul.f32 %v1039, %v1118
        %v1121 = vsub.f32 1.0, %v1120
        %v1122 = vmul.f32 %v1121, -0.5
        %1123 = vset.pattern.permute.xlu0 1
        %1124 = vperm.xlu0 %1123, %v1114
        %v1125 = vpop.permute.xlu0 %1124
        %v1127 = vmul.f32 %v1039, %v1125
        %v1128 = vsub.f32 1.0, %v1127
        %v1129 = vmul.f32 %v1128, -0.5
        %1130 = vset.pattern.permute.xlu0 2
        %1131 = vperm.xlu0 %1130, %v1114
        %v1132 = vpop.permute.xlu0 %1131
        %v1134 = vmul.f32 %v1039, %v1132
        %v1135 = vsub.f32 1.0, %v1134
        %v1136 = vmul.f32 %v1135, -0.5
        %1137 = vset.pattern.permute.xlu0 3
        %1138 = vperm.xlu0 %1137, %v1114
        %v1139 = vpop.permute.xlu0 %1138
        %v1141 = vmul.f32 %v1039, %v1139
        %v1142 = vsub.f32 1.0, %v1141
        %v1143 = vmul.f32 %v1142, -0.5
        %v1144 = vsel %vm554, %v1122, -inf
        %1145 = vmax.xlane.f32.xlu0 %v1144
        %v1146 = vpop.xlane.xlu0 %1145
        %v1147 = vsub.f32 %v1122, %v1146
        %v1148 = vmul.f32 %v1147, 1.442695
        %v1149 = vpow.pop %v1148
        %v1150 = vsel %vm554, %v1149, 0.0
        %1151 = vadd.xlane.f32.xlu0 %v1150
        %v1152 = vpop.xlane.xlu0 %1151
        %v1153 = vrcp.pop %v1152
        %v1154 = vmul.f32 %v1149, %v1153
        %vm1155 = vcmask 64544
        %v1156 = vsel %vm1155, %v1129, -inf
        %1157 = vmax.xlane.f32.xlu0 %v1156
        %v1158 = vpop.xlane.xlu0 %1157
        %v1159 = vsub.f32 %v1129, %v1158
        %v1160 = vmul.f32 %v1159, 1.442695
        %v1161 = vpow.pop %v1160
        %1163 = vrot.lane.b32.xlu0 %v1161, 124
        %v1164 = vpop.permute.xlu0 %1163
        %v1166 = vsel %vm554, %v1164, 0.0
        %1167 = vadd.xlane.f32.xlu0 %v1166
        %v1168 = vpop.xlane.xlu0 %1167
        %v1169 = vrcp.pop %v1168
        %v1170 = vmul.f32 %v1161, %v1169
        %vm1171 = vcmask 97344
        %v1172 = vsel %vm1171, %v1136, -inf
        %1173 = vmax.xlane.f32.xlu0 %v1172
        %v1174 = vpop.xlane.xlu0 %1173
        %v1175 = vsub.f32 %v1136, %v1174
        %v1176 = vmul.f32 %v1175, 1.442695
        %v1177 = vpow.pop %v1176
        %1179 = vrot.lane.b32.xlu0 %v1177, 120
        %v1180 = vpop.permute.xlu0 %1179
        %v1182 = vsel %vm554, %v1180, 0.0
        %1183 = vadd.xlane.f32.xlu0 %v1182
        %v1184 = vpop.xlane.xlu0 %1183
        %v1185 = vrcp.pop %v1184
        %v1186 = vmul.f32 %v1177, %v1185
        %vm1187 = vcmask 130144
        %v1188 = vsel %vm1187, %v1143, -inf
        %1189 = vmax.xlane.f32.xlu0 %v1188
        %v1190 = vpop.xlane.xlu0 %1189
        %v1191 = vsub.f32 %v1143, %v1190
        %v1192 = vmul.f32 %v1191, 1.442695
        %v1193 = vpow.pop %v1192
        %1195 = vrot.lane.b32.xlu0 %v1193, 116
        %v1196 = vpop.permute.xlu0 %1195
        %v1198 = vsel %vm554, %v1196, 0.0
        %1199 = vadd.xlane.f32.xlu0 %v1198
        %v1200 = vpop.xlane.xlu0 %1199
        %v1201 = vrcp.pop %v1200
        %v1202 = vmul.f32 %v1193, %v1201
        %1204 = vrot.lane.b32.xlu0 %v1129, 124
        %v1205 = vpop.permute.xlu0 %1204
        %v1207 = vmax.f32 %v1122, %v1205
        %1209 = vrot.lane.b32.xlu0 %v1136, 120
        %v1210 = vpop.permute.xlu0 %1209
        %v1212 = vmax.f32 %v1207, %v1210
        %1214 = vrot.lane.b32.xlu0 %v1143, 116
        %v1215 = vpop.permute.xlu0 %1214
        %v1217 = vmax.f32 %v1212, %v1215
        %v1218 = vsub.f32 %v1122, %v1217
        %v1219 = vmul.f32 %v1218, 1.442695
        %v1220 = vpow.pop %v1219
        %1222 = vrot.lane.b32.xlu0 %v1217, 4
        %v1223 = vpop.permute.xlu0 %1222
        %v1225 = vsub.f32 %v1129, %v1223
        %v1226 = vmul.f32 %v1225, 1.442695
        %v1227 = vpow.pop %v1226
        %1228 = vrot.lane.b32.xlu0 %v1217, 8
        %v1229 = vpop.permute.xlu0 %1228
        %v1231 = vsub.f32 %v1136, %v1229
        %v1232 = vmul.f32 %v1231, 1.442695
        %v1233 = vpow.pop %v1232
        %1234 = vrot.lane.b32.xlu0 %v1217, 12
        %v1235 = vpop.permute.xlu0 %1234
        %v1237 = vsub.f32 %v1143, %v1235
        %v1238 = vmul.f32 %v1237, 1.442695
        %v1239 = vpow.pop %v1238
        %1241 = vrot.lane.b32.xlu0 %v1227, 124
        %v1242 = vpop.permute.xlu0 %1241
        %v1244 = vadd.f32 %v1220, %v1242
        %1246 = vrot.lane.b32.xlu0 %v1233, 120
        %v1247 = vpop.permute.xlu0 %1246
        %v1249 = vadd.f32 %v1244, %v1247
        %1251 = vrot.lane.b32.xlu0 %v1239, 116
        %v1252 = vpop.permute.xlu0 %1251
        %v1254 = vadd.f32 %v1249, %v1252
        %v1255 = vrcp.pop %v1254
        %v1256 = vmul.f32 1.0, %v1255
        %1258 = vset.pattern.permute.xlu0 0
        %1259 = vperm.xlu0 %1258, %v576
        %v1260 = vpop.permute.xlu0 %1259
        %v1262 = vmul.f32 %v1154, %v1260
        %1263 = vset.pattern.permute.xlu0 1
        %1264 = vperm.xlu0 %1263, %v576
        %v1265 = vpop.permute.xlu0 %1264
        %v1267 = vmul.f32 %v1170, %v1265
        %1269 = vrot.lane.b32.xlu0 %v1267, 124
        %v1270 = vpop.permute.xlu0 %1269
        %v1272 = vadd.f32 %v1262, %v1270
        %1273 = vset.pattern.permute.xlu0 2
        %1274 = vperm.xlu0 %1273, %v576
        %v1275 = vpop.permute.xlu0 %1274
        %v1277 = vmul.f32 %v1186, %v1275
        %1279 = vrot.lane.b32.xlu0 %v1277, 120
        %v1280 = vpop.permute.xlu0 %1279
        %v1282 = vadd.f32 %v1272, %v1280
        %1283 = vset.pattern.permute.xlu0 3
        %1284 = vperm.xlu0 %1283, %v576
        %v1285 = vpop.permute.xlu0 %1284
        %v1287 = vmul.f32 %v1202, %v1285
        %1289 = vrot.lane.b32.xlu0 %v1287, 116
        %v1290 = vpop.permute.xlu0 %1289
        %v1292 = vadd.f32 %v1282, %v1290
        %v1293 = vsel %vm554, %v1292, -inf
        %1294 = vmax.xlane.f32.xlu0 %v1293
        %v1295 = vpop.xlane.xlu0 %1294
        %v1296 = vsub.f32 %v1292, %v1295
        %v1297 = vmul.f32 %v1296, 1.442695
        %v1298 = vpow.pop %v1297
        %v1299 = vsel %vm554, %v1298, 0.0
        %1300 = vadd.xlane.f32.xlu0 %v1299
        %v1301 = vpop.xlane.xlu0 %1300
        %v1302 = vrcp.pop %v1301
        %v1303 = vmul.f32 %v1298, %v1302
        %v1304 = vld [vmem:[%s4] sm:$0x1]
        %v1306 = vlaneseq
        %v1307 = vshrl.u32 %v1306, 7
        %v1308 = vsub.s32 0, %v1307
        %v1309 = vrot.slane %v1304, %v1308
        %v1311 = vmul.f32 %v1220, %v1256
        %v1313 = vsel %vm554, %v1311, 0
        %vm1315 = vcmask 1043456
        %v1317 = vsel %vm1315, %v435, 0
        %1319 = vmatprep.subr.mxu0 0.0
        %1320 = vmatpush1.msra.mxu0 0.0
        %1321 = vmatprep.subr.mxu0 0.0
        %1322 = vmatpush1.msra.mxu0 0.0
        %1323 = vmatprep.subr.mxu0 0.0
        %1324 = vmatpush1.msra.mxu0 0.0
        %1325 = vmatprep.subr.mxu0 0.0
        %1326 = vmatpush1.msra.mxu0 0.0
        %1327 = vmatprep.subr.mxu0 0.0
        %1328 = vmatpush1.msra.mxu0 0.0
        %1329 = vmatprep.subr.mxu0 0.0
        %1330 = vmatpush1.msra.mxu0 0.0
        %1331 = vmatprep.subr.mxu0 0.0
        %1332 = vmatpush1.msra.mxu0 0.0
        %1333 = vmatprep.subr.mxu0 0.0
        %1334 = vmatpush1.msra.mxu0 0.0
        %1335 = vmatprep.subr.mxu0 0.0
        %1336 = vmatpush1.msra.mxu0 0.0
        %1337 = vmatprep.subr.mxu0 0.0
        %1338 = vmatpush1.msra.mxu0 0.0
        %1339 = vmatprep.subr.mxu0 0.0
        %1340 = vmatpush1.msra.mxu0 0.0
        %1341 = vmatprep.subr.mxu0 0.0
        %1342 = vmatpush1.msra.mxu0 0.0
        %1343 = vmatprep.subr.mxu0 0.0
        %1344 = vmatpush1.msra.mxu0 0.0
        %1345 = vmatprep.subr.mxu0 0.0
        %1346 = vmatpush1.msra.mxu0 0.0
        %1347 = vmatprep.subr.mxu0 0.0
        %1348 = vmatpush1.msra.mxu0 0.0
        %1349 = vmatprep.subr.mxu0 0.0
        %1350 = vmatpush1.msra.mxu0 %v1317
        %1351 = vmatprep.subr.mxu0 0.0
        %1352 = vmatpush2.msra.mxu0 0.0
        %1353 = vmatprep.subr.mxu0 0.0
        %1354 = vmatpush2.msra.mxu0 0.0
        %1355 = vmatprep.subr.mxu0 0.0
        %1356 = vmatpush2.msra.mxu0 0.0
        %1357 = vmatprep.subr.mxu0 0.0
        %1358 = vmatpush2.msra.mxu0 0.0
        %1359 = vmatprep.subr.mxu0 0.0
        %1360 = vmatpush2.msra.mxu0 0.0
        %1361 = vmatprep.subr.mxu0 0.0
        %1362 = vmatpush2.msra.mxu0 0.0
        %1363 = vmatprep.subr.mxu0 0.0
        %1364 = vmatpush2.msra.mxu0 0.0
        %1365 = vmatprep.subr.mxu0 0.0
        %1366 = vmatpush2.msra.mxu0 0.0
        %1367 = vmatprep.subr.mxu0 0.0
        %1368 = vmatpush2.msra.mxu0 0.0
        %1369 = vmatprep.subr.mxu0 0.0
        %1370 = vmatpush2.msra.mxu0 0.0
        %1371 = vmatprep.subr.mxu0 0.0
        %1372 = vmatpush2.msra.mxu0 0.0
        %1373 = vmatprep.subr.mxu0 0.0
        %1374 = vmatpush2.msra.mxu0 0.0
        %1375 = vmatprep.subr.mxu0 0.0
        %1376 = vmatpush2.msra.mxu0 0.0
        %1377 = vmatprep.subr.mxu0 0.0
        %1378 = vmatpush2.msra.mxu0 0.0
        %1379 = vmatprep.subr.mxu0 0.0
        %1380 = vmatpush2.msra.mxu0 0.0
        %1381 = vmatprep.subr.mxu0 0.0
        %1382 = vmatpush2.msra.mxu0 0.0
        %1383 = vmatprep.mubr.f32.mxu0 0.0
        %1384 = vmatmul.mubr.f32.gmra.mxu0 %v1313
        %v1385 = vpop.f32.mrf.mxu0
        %v1386 = vadd.f32 0.0, %v1385
        %v1387 = vpop.f32.mrf.mxu0
        %1388 = vdwg.mxu0
        %v1389 = vadd.f32 %v897, %v1309
        %v1390 = vmax.f32 %v1389, 0.0
        %v1391 = vmul.f32 %v1386, %v1390
        %1393 = vrot.lane.b32.xlu0 %v1256, 4
        %v1394 = vpop.permute.xlu0 %1393
        %v1396 = vmul.f32 %v1227, %v1394
        %1398 = vrot.lane.b32.xlu0 %v1396, 124
        %v1399 = vpop.permute.xlu0 %1398
        %v1400 = vsel %vm554, %v1399, 0
        %1402 = vmatprep.subr.mxu0 0.0
        %1403 = vmatpush1.msra.mxu0 0.0
        %1404 = vmatprep.subr.mxu0 0.0
        %1405 = vmatpush1.msra.mxu0 0.0
        %1406 = vmatprep.subr.mxu0 0.0
        %1407 = vmatpush1.msra.mxu0 0.0
        %1408 = vmatprep.subr.mxu0 0.0
        %1409 = vmatpush1.msra.mxu0 0.0
        %1410 = vmatprep.subr.mxu0 0.0
        %1411 = vmatpush1.msra.mxu0 0.0
        %1412 = vmatprep.subr.mxu0 0.0
        %1413 = vmatpush1.msra.mxu0 0.0
        %1414 = vmatprep.subr.mxu0 0.0
        %1415 = vmatpush1.msra.mxu0 0.0
        %1416 = vmatprep.subr.mxu0 0.0
        %1417 = vmatpush1.msra.mxu0 0.0
        %1418 = vmatprep.subr.mxu0 0.0
        %1419 = vmatpush1.msra.mxu0 0.0
        %1420 = vmatprep.subr.mxu0 0.0
        %1421 = vmatpush1.msra.mxu0 0.0
        %1422 = vmatprep.subr.mxu0 0.0
        %1423 = vmatpush1.msra.mxu0 0.0
        %1424 = vmatprep.subr.mxu0 0.0
        %1425 = vmatpush1.msra.mxu0 0.0
        %1426 = vmatprep.subr.mxu0 0.0
        %1427 = vmatpush1.msra.mxu0 0.0
        %1428 = vmatprep.subr.mxu0 0.0
        %1429 = vmatpush1.msra.mxu0 0.0
        %1430 = vmatprep.subr.mxu0 0.0
        %1431 = vmatpush1.msra.mxu0 0.0
        %1432 = vmatprep.subr.mxu0 0.0
        %1433 = vmatpush1.msra.mxu0 %v1317
        %1434 = vmatprep.subr.mxu0 0.0
        %1435 = vmatpush2.msra.mxu0 0.0
        %1436 = vmatprep.subr.mxu0 0.0
        %1437 = vmatpush2.msra.mxu0 0.0
        %1438 = vmatprep.subr.mxu0 0.0
        %1439 = vmatpush2.msra.mxu0 0.0
        %1440 = vmatprep.subr.mxu0 0.0
        %1441 = vmatpush2.msra.mxu0 0.0
        %1442 = vmatprep.subr.mxu0 0.0
        %1443 = vmatpush2.msra.mxu0 0.0
        %1444 = vmatprep.subr.mxu0 0.0
        %1445 = vmatpush2.msra.mxu0 0.0
        %1446 = vmatprep.subr.mxu0 0.0
        %1447 = vmatpush2.msra.mxu0 0.0
        %1448 = vmatprep.subr.mxu0 0.0
        %1449 = vmatpush2.msra.mxu0 0.0
        %1450 = vmatprep.subr.mxu0 0.0
        %1451 = vmatpush2.msra.mxu0 0.0
        %1452 = vmatprep.subr.mxu0 0.0
        %1453 = vmatpush2.msra.mxu0 0.0
        %1454 = vmatprep.subr.mxu0 0.0
        %1455 = vmatpush2.msra.mxu0 0.0
        %1456 = vmatprep.subr.mxu0 0.0
        %1457 = vmatpush2.msra.mxu0 0.0
        %1458 = vmatprep.subr.mxu0 0.0
        %1459 = vmatpush2.msra.mxu0 0.0
        %1460 = vmatprep.subr.mxu0 0.0
        %1461 = vmatpush2.msra.mxu0 0.0
        %1462 = vmatprep.subr.mxu0 0.0
        %1463 = vmatpush2.msra.mxu0 0.0
        %1464 = vmatprep.subr.mxu0 0.0
        %1465 = vmatpush2.msra.mxu0 0.0
        %1466 = vmatprep.mubr.f32.mxu0 0.0
        %1467 = vmatmul.mubr.f32.gmra.mxu0 %v1400
        %v1468 = vpop.f32.mrf.mxu0
        %v1469 = vadd.f32 0.0, %v1468
        %v1470 = vpop.f32.mrf.mxu0
        %1471 = vdwg.mxu0
        %v1472 = vadd.f32 %v899, %v1309
        %v1473 = vmax.f32 %v1472, 0.0
        %v1474 = vmul.f32 %v1469, %v1473
        %v1475 = vadd.f32 %v1391, %v1474
        %1476 = vrot.lane.b32.xlu0 %v1256, 8
        %v1477 = vpop.permute.xlu0 %1476
        %v1479 = vmul.f32 %v1233, %v1477
        %1481 = vrot.lane.b32.xlu0 %v1479, 120
        %v1482 = vpop.permute.xlu0 %1481
        %v1483 = vsel %vm554, %v1482, 0
        %1485 = vmatprep.subr.mxu0 0.0
        %1486 = vmatpush1.msra.mxu0 0.0
        %1487 = vmatprep.subr.mxu0 0.0
        %1488 = vmatpush1.msra.mxu0 0.0
        %1489 = vmatprep.subr.mxu0 0.0
        %1490 = vmatpush1.msra.mxu0 0.0
        %1491 = vmatprep.subr.mxu0 0.0
        %1492 = vmatpush1.msra.mxu0 0.0
        %1493 = vmatprep.subr.mxu0 0.0
        %1494 = vmatpush1.msra.mxu0 0.0
        %1495 = vmatprep.subr.mxu0 0.0
        %1496 = vmatpush1.msra.mxu0 0.0
        %1497 = vmatprep.subr.mxu0 0.0
        %1498 = vmatpush1.msra.mxu0 0.0
        %1499 = vmatprep.subr.mxu0 0.0
        %1500 = vmatpush1.msra.mxu0 0.0
        %1501 = vmatprep.subr.mxu0 0.0
        %1502 = vmatpush1.msra.mxu0 0.0
        %1503 = vmatprep.subr.mxu0 0.0
        %1504 = vmatpush1.msra.mxu0 0.0
        %1505 = vmatprep.subr.mxu0 0.0
        %1506 = vmatpush1.msra.mxu0 0.0
        %1507 = vmatprep.subr.mxu0 0.0
        %1508 = vmatpush1.msra.mxu0 0.0
        %1509 = vmatprep.subr.mxu0 0.0
        %1510 = vmatpush1.msra.mxu0 0.0
        %1511 = vmatprep.subr.mxu0 0.0
        %1512 = vmatpush1.msra.mxu0 0.0
        %1513 = vmatprep.subr.mxu0 0.0
        %1514 = vmatpush1.msra.mxu0 0.0
        %1515 = vmatprep.subr.mxu0 0.0
        %1516 = vmatpush1.msra.mxu0 %v1317
        %1517 = vmatprep.subr.mxu0 0.0
        %1518 = vmatpush2.msra.mxu0 0.0
        %1519 = vmatprep.subr.mxu0 0.0
        %1520 = vmatpush2.msra.mxu0 0.0
        %1521 = vmatprep.subr.mxu0 0.0
        %1522 = vmatpush2.msra.mxu0 0.0
        %1523 = vmatprep.subr.mxu0 0.0
        %1524 = vmatpush2.msra.mxu0 0.0
        %1525 = vmatprep.subr.mxu0 0.0
        %1526 = vmatpush2.msra.mxu0 0.0
        %1527 = vmatprep.subr.mxu0 0.0
        %1528 = vmatpush2.msra.mxu0 0.0
        %1529 = vmatprep.subr.mxu0 0.0
        %1530 = vmatpush2.msra.mxu0 0.0
        %1531 = vmatprep.subr.mxu0 0.0
        %1532 = vmatpush2.msra.mxu0 0.0
        %1533 = vmatprep.subr.mxu0 0.0
        %1534 = vmatpush2.msra.mxu0 0.0
        %1535 = vmatprep.subr.mxu0 0.0
        %1536 = vmatpush2.msra.mxu0 0.0
        %1537 = vmatprep.subr.mxu0 0.0
        %1538 = vmatpush2.msra.mxu0 0.0
        %1539 = vmatprep.subr.mxu0 0.0
        %1540 = vmatpush2.msra.mxu0 0.0
        %1541 = vmatprep.subr.mxu0 0.0
        %1542 = vmatpush2.msra.mxu0 0.0
        %1543 = vmatprep.subr.mxu0 0.0
        %1544 = vmatpush2.msra.mxu0 0.0
        %1545 = vmatprep.subr.mxu0 0.0
        %1546 = vmatpush2.msra.mxu0 0.0
        %1547 = vmatprep.subr.mxu0 0.0
        %1548 = vmatpush2.msra.mxu0 0.0
        %1549 = vmatprep.mubr.f32.mxu0 0.0
        %1550 = vmatmul.mubr.f32.gmra.mxu0 %v1483
        %v1551 = vpop.f32.mrf.mxu0
        %v1552 = vadd.f32 0.0, %v1551
        %v1553 = vpop.f32.mrf.mxu0
        %1554 = vdwg.mxu0
        %v1555 = vadd.f32 %v968, %v1309
        %v1556 = vmax.f32 %v1555, 0.0
        %v1557 = vmul.f32 %v1552, %v1556
        %v1558 = vadd.f32 %v1475, %v1557
        %1559 = vrot.lane.b32.xlu0 %v1256, 12
        %v1560 = vpop.permute.xlu0 %1559
        %v1562 = vmul.f32 %v1239, %v1560
        %1564 = vrot.lane.b32.xlu0 %v1562, 116
        %v1565 = vpop.permute.xlu0 %1564
        %v1566 = vsel %vm554, %v1565, 0
        %1568 = vmatprep.subr.mxu0 0.0
        %1569 = vmatpush1.msra.mxu0 0.0
        %1570 = vmatprep.subr.mxu0 0.0
        %1571 = vmatpush1.msra.mxu0 0.0
        %1572 = vmatprep.subr.mxu0 0.0
        %1573 = vmatpush1.msra.mxu0 0.0
        %1574 = vmatprep.subr.mxu0 0.0
        %1575 = vmatpush1.msra.mxu0 0.0
        %1576 = vmatprep.subr.mxu0 0.0
        %1577 = vmatpush1.msra.mxu0 0.0
        %1578 = vmatprep.subr.mxu0 0.0
        %1579 = vmatpush1.msra.mxu0 0.0
        %1580 = vmatprep.subr.mxu0 0.0
        %1581 = vmatpush1.msra.mxu0 0.0
        %1582 = vmatprep.subr.mxu0 0.0
        %1583 = vmatpush1.msra.mxu0 0.0
        %1584 = vmatprep.subr.mxu0 0.0
        %1585 = vmatpush1.msra.mxu0 0.0
        %1586 = vmatprep.subr.mxu0 0.0
        %1587 = vmatpush1.msra.mxu0 0.0
        %1588 = vmatprep.subr.mxu0 0.0
        %1589 = vmatpush1.msra.mxu0 0.0
        %1590 = vmatprep.subr.mxu0 0.0
        %1591 = vmatpush1.msra.mxu0 0.0
        %1592 = vmatprep.subr.mxu0 0.0
        %1593 = vmatpush1.msra.mxu0 0.0
        %1594 = vmatprep.subr.mxu0 0.0
        %1595 = vmatpush1.msra.mxu0 0.0
        %1596 = vmatprep.subr.mxu0 0.0
        %1597 = vmatpush1.msra.mxu0 0.0
        %1598 = vmatprep.subr.mxu0 0.0
        %1599 = vmatpush1.msra.mxu0 %v1317
        %1600 = vmatprep.subr.mxu0 0.0
        %1601 = vmatpush2.msra.mxu0 0.0
        %1602 = vmatprep.subr.mxu0 0.0
        %1603 = vmatpush2.msra.mxu0 0.0
        %1604 = vmatprep.subr.mxu0 0.0
        %1605 = vmatpush2.msra.mxu0 0.0
        %1606 = vmatprep.subr.mxu0 0.0
        %1607 = vmatpush2.msra.mxu0 0.0
        %1608 = vmatprep.subr.mxu0 0.0
        %1609 = vmatpush2.msra.mxu0 0.0
        %1610 = vmatprep.subr.mxu0 0.0
        %1611 = vmatpush2.msra.mxu0 0.0
        %1612 = vmatprep.subr.mxu0 0.0
        %1613 = vmatpush2.msra.mxu0 0.0
        %1614 = vmatprep.subr.mxu0 0.0
        %1615 = vmatpush2.msra.mxu0 0.0
        %1616 = vmatprep.subr.mxu0 0.0
        %1617 = vmatpush2.msra.mxu0 0.0
        %1618 = vmatprep.subr.mxu0 0.0
        %1619 = vmatpush2.msra.mxu0 0.0
        %1620 = vmatprep.subr.mxu0 0.0
        %1621 = vmatpush2.msra.mxu0 0.0
        %1622 = vmatprep.subr.mxu0 0.0
        %1623 = vmatpush2.msra.mxu0 0.0
        %1624 = vmatprep.subr.mxu0 0.0
        %1625 = vmatpush2.msra.mxu0 0.0
        %1626 = vmatprep.subr.mxu0 0.0
        %1627 = vmatpush2.msra.mxu0 0.0
        %1628 = vmatprep.subr.mxu0 0.0
        %1629 = vmatpush2.msra.mxu0 0.0
        %1630 = vmatprep.subr.mxu0 0.0
        %1631 = vmatpush2.msra.mxu0 0.0
        %1632 = vmatprep.mubr.f32.mxu0 0.0
        %1633 = vmatmul.mubr.f32.gmra.mxu0 %v1566
        %v1634 = vpop.f32.mrf.mxu0
        %v1635 = vadd.f32 0.0, %v1634
        %v1636 = vpop.f32.mrf.mxu0
        %1637 = vdwg.mxu0
        %v1638 = vadd.f32 %v970, %v1309
        %v1639 = vmax.f32 %v1638, 0.0
        %v1640 = vmul.f32 %v1635, %v1639
        %v1641 = vadd.f32 %v1558, %v1640
        %1642 = vst [vmem:[%s430] sm:$0xff] %v1641
        %1644 = vrot.lane.b32.xlu0 %v1303, 4
        %v1645 = vpop.permute.xlu0 %1644
        %v1647 = vsel %vm554, %v576, %v1645
        %vm1648 = vcmask 64512
        %1649 = vst.msk [vmem:[%s434] sm:$0xff] %vm1648, %v1647
        %p1650 = scmp.lt.s32.totalorder %s23, 1
        %s1651 = scalar_select %p1650, %s23, 1
        %s1652 = smul.addr %s1651, 8
        %s1653 = scalar_lea.vmem %s10, %s1652
        %p1654 = scmp.lt.s32.totalorder %s23, 1
        %s1655 = scalar_select %p1654, %s23, 1
        %s1656 = smul.addr %s1655, 8
        %s1657 = scalar_lea.vmem %s11, %s1656
        // Predicated region
        $region99: #{model_forward.3} parent=93 // pred_check
          %p1658 = pneg %p256
        $region100: #{model_forward.3} parent=93 // pred_check_branch
          %1660 = sbr.rel (%p1658) target = $region102
        $region101: #{model_forward.3} parent=93 // pred_region
          _
        $region102: #{model_forward.3} parent=93 // pred_fallthru
          _
        // Predicated region
        $region103: #{model_forward.3} parent=93 // pred_check
          %p1661 = pneg %p282
        $region104: #{model_forward.3} parent=93 // pred_check_branch
          %1663 = sbr.rel (%p1661) target = $region106
        $region105: #{model_forward.3} parent=93 // pred_region
          _
        $region106: #{model_forward.3} parent=93 // pred_fallthru
          _
      $region94: #{model_forward.3} parent=5 // pred_fallthru
        _
      %p1664 = scmp.le.s32.totalorder 2, %s18
      // Predicated region
      $region107: #{model_forward.3} parent=5 // pred_check
        %p1665 = pneg %p1664
      $region108: #{model_forward.3} parent=5 // pred_check_branch
        %1667 = sbr.rel (%p1665) target = $region110
      $region109: #{model_forward.3} parent=5 // pred_region
        %s1668 = ssub.s32 %s18, 2
        // Predicated region
        $region111: #{model_forward.3} parent=109 // pred_check
          %p1669 = pneg %p262
        $region112: #{model_forward.3} parent=109 // pred_check_branch
          %1671 = sbr.rel (%p1669) target = $region114
        $region113: #{model_forward.3} parent=109 // pred_region
          %p1672 = scmp.lt.s32.totalorder %s24, 1
          %s1673 = scalar_select %p1672, %s24, 1
          %s1674 = smul.addr %s1673, 8
          %s1675 = scalar_lea.vmem %s10, %s1674
        $region114: #{model_forward.3} parent=109 // pred_fallthru
          _
        // Predicated region
        $region115: #{model_forward.3} parent=109 // pred_check
          %p1676 = pneg %p288
        $region116: #{model_forward.3} parent=109 // pred_check_branch
          %1678 = sbr.rel (%p1676) target = $region118
        $region117: #{model_forward.3} parent=109 // pred_region
          %p1679 = scmp.lt.s32.totalorder %s24, 1
          %s1680 = scalar_select %p1679, %s24, 1
          %s1681 = smul.addr %s1680, 8
          %s1682 = scalar_lea.vmem %s11, %s1681
        $region118: #{model_forward.3} parent=109 // pred_fallthru
          _
      $region110: #{model_forward.3} parent=5 // pred_fallthru
        _
    $region6: #{model_forward.3} parent=1 // loop_footer
      %s22 = sadd.s32 1, %s18
    $region7: #{model_forward.3} parent=1 // loop_footer_branch
      %17 = sbr.rel target = $region3
    $region8: #{model_forward.3} parent=1 // loop_exit
      _

</llo_original>
